<compile_context>
chip_gen: v5e
topology: v5e:2x2
jax: 0.10.0
libtpu: 0.0.40
codegen_flags: <defaults>
</compile_context>

<pallas_src>
import math

import jax
import jax.numpy as jnp
from jax.experimental import pallas as pl
from jax.experimental.pallas import tpu as pltpu


def _query_reform_kernel(q_ref, ent_ref, seed_ref, w_ref, out_ref):
    # q: (bt, H) -> f32 for the gating arithmetic (small cast).
    q = q_ref[...].astype(jnp.float32)

    # seed_retrieve: contract the small C axis.  seed arrives as (bt, C, 1)
    # (C on sublanes), so broadcasting over H is a cheap lane-broadcast; the
    # multiply runs in the native dtype and only the reduction accumulates in
    # f32 -- no full f32 copy of the ent tile is materialized.
    y = jnp.sum(seed_ref[...] * ent_ref[...], axis=1, dtype=jnp.float32)  # (bt, H)

    # Folded Fusion input: [q, y, q*y]  (the (q - y) term is folded into W).
    z = jnp.concatenate([q, y, q * y], axis=-1)                           # (bt, 3H)

    # Single fused gate matmul on the MXU: (bt, 3H) @ (3H, 2H) -> (bt, 2H).
    w = w_ref[...]                      # native dtype, never upcast per step
    if w.dtype != jnp.float32:          # bf16 weights: feed the MXU natively
        z = z.astype(w.dtype)
    pre = jnp.dot(z, w, preferred_element_type=jnp.float32)

    H = q.shape[-1]
    r = jnp.tanh(pre[:, :H])
    g = jax.nn.sigmoid(pre[:, H:])
    out_ref[...] = (g * r + (1.0 - g) * q).astype(out_ref.dtype)


def _fold_gate_weights(r_weight, g_weight, H):
    """Fold cat([x, y, x-y, x*y]) @ W^T into [x, y, x*y] @ W_fold and pack the
    r/g gates along N.  Returns a (3H, 2H) matrix = [Wr_fold^T | Wg_fold^T]."""
    def fold_t(w):                                        # (H, 4H) -> (3H, H)
        w = jnp.asarray(w)
        w1, w2, w3, w4 = (w[:, :H], w[:, H:2 * H],
                          w[:, 2 * H:3 * H], w[:, 3 * H:])
        return jnp.concatenate([(w1 + w3).T, (w2 - w3).T, w4.T], axis=0)
    return jnp.concatenate([fold_t(r_weight), fold_t(g_weight)], axis=1)


def _tpu_budget():
    """(vmem_limit_bytes, ent_emb tile target bytes per step, min grid steps)."""
    kind = ""
    try:
        kind = jax.devices()[0].device_kind.lower()
    except Exception:
        pass
    if "v7" in kind:
        # 64 MiB physical VMEM, 2 TCs: ~10 MiB tile (x2 double-buffered), and
        # require >= 2 grid steps so megacore keeps both TensorCores busy.
        return 48 * 1024 * 1024, 10 * 1024 * 1024, 2
    if "v5" in kind:
        # v5e: 128 MiB physical VMEM but only a 16 MiB default scoped limit.
        return 64 * 1024 * 1024, 8 * 1024 * 1024, 1
    # v6e (and default): 128 MiB physical VMEM, 1.4 TB/s HBM.
    return 64 * 1024 * 1024, 16 * 1024 * 1024, 1


def _choose_batch_tile(B, ent_row_bytes, target_bytes, min_steps):
    """Largest multiple-of-8 divisor of B whose ent_emb tile fits target_bytes
    and that leaves at least `min_steps` grid steps.  B is a multiple of 8."""
    cap = (target_bytes // max(ent_row_bytes, 1)) // 8 * 8
    cap = max(8, min(B, cap))
    if min_steps > 1 and B >= 8 * min_steps:
        cap = min(cap, max(8, (B // min_steps) // 8 * 8))
    divisors = [d for d in range(8, cap + 1, 8) if B % d == 0]
    if not divisors:
        return 8
    if min_steps > 1:
        even = [d for d in divisors if (B // d) % 2 == 0]   # balanced megacore
        if even:
            return max(even)
    return max(divisors)


def query_reform(q_node, ent_emb, seed_info, ent_mask,
                 r_weight, g_weight,
                 q_ent_attn_weight=None, q_ent_attn_bias=None,
                 *, batch_tile=None):
    """Pallas implementation of QueryReform.forward.

    q_node: (B, H), ent_emb: (B, C, H), seed_info: (B, C), ent_mask: (B, C)
    r_weight / g_weight: (H, 4H)  [Fusion.r / Fusion.g, bias=False]
    ent_mask / q_ent_attn_* only feed the dead attention branch of the
    reference forward and are accepted for API parity.
    Returns: (B, H) in q_node's dtype.
    """
    del ent_mask, q_ent_attn_weight, q_ent_attn_bias   # dead code in reference

    q_node = jnp.asarray(q_node)
    ent_emb = jnp.asarray(ent_emb)
    seed_info = jnp.asarray(seed_info)

    B, H = q_node.shape
    Bc, C, Hc = ent_emb.shape
    assert (Bc, Hc) == (B, H) and seed_info.shape == (B, C)

    # Fold + fuse the two Fusion gate weights into one (3H, 2H) matrix.
    w = _fold_gate_weights(r_weight, g_weight, H)

    # Pad the batch to a multiple of 8 (zero rows; sliced off afterwards).
    B_pad = -(-B // 8) * 8
    if B_pad != B:
        pad = B_pad - B
        q_node = jnp.pad(q_node, ((0, pad), (0, 0)))
        ent_emb = jnp.pad(ent_emb, ((0, pad), (0, 0), (0, 0)))
        seed_info = jnp.pad(seed_info, ((0, pad), (0, 0)))

    # (B, C, 1): C on sublanes -> broadcast over H inside the kernel is a
    # lane-broadcast, not a lane->sublane relayout.
    seed3 = seed_info.reshape(B_pad, C, 1)

    vmem_limit, ent_target, min_steps = _tpu_budget()
    ent_row_bytes = C * H * ent_emb.dtype.itemsize
    if batch_tile is None:
        bt = _choose_batch_tile(B_pad, ent_row_bytes, ent_target, min_steps)
    else:
        bt = batch_tile
        assert bt % 8 == 0 and B_pad % bt == 0, \
            "batch_tile must be a multiple of 8 that divides the padded batch"

    grid = (B_pad // bt,)

    def make_call(single_buffer_weights):
        if single_buffer_weights:
            # Constant-index resident weight: one buffer is enough.
            w_spec = pl.BlockSpec((3 * H, 2 * H), lambda i: (0, 0),
                                  pipeline_mode=pl.Buffered(1))
        else:
            w_spec = pl.BlockSpec((3 * H, 2 * H), lambda i: (0, 0))
        return pl.pallas_call(
            _query_reform_kernel,
            out_shape=jax.ShapeDtypeStruct((B_pad, H), q_node.dtype),
            grid_spec=pltpu.PrefetchScalarGridSpec(
                num_scalar_prefetch=0,
                grid=grid,
                in_specs=[
                    pl.BlockSpec((bt, H), lambda i: (i, 0)),        # q tile
                    pl.BlockSpec((bt, C, H), lambda i: (i, 0, 0)),  # ent tile
                    pl.BlockSpec((bt, C, 1), lambda i: (i, 0, 0)),  # seed tile
                    w_spec,                                         # fused W
                ],
                out_specs=pl.BlockSpec((bt, H), lambda i: (i, 0)),  # lane-dense
            ),
            compiler_params=pltpu.CompilerParams(
                dimension_semantics=("parallel",),   # v7x: shard batch on 2 TCs
                vmem_limit_bytes=vmem_limit,
            ),
        )

    try:
        out = make_call(True)(q_node, ent_emb, seed3, w)
        out = jax.block_until_ready(out)
    except Exception:
        # pipeline_mode=pl.Buffered(1) not supported by this jax version:
        # fall back to the default (still constant-index) weight buffering.
        out = make_call(False)(q_node, ent_emb, seed3, w)

    return out[:B] if B_pad != B else out


if __name__ == "__main__":
    # Small deterministic example: batch=64, entities=16, hidden=128.
    B, C, H = 64, 16, 128
    key = jax.random.PRNGKey(0)
    kq, ke, ks, km, kr, kg = jax.random.split(key, 6)

    q_node = jax.random.normal(kq, (B, H), dtype=jnp.float32)
    ent_emb = jax.random.normal(ke, (B, C, H), dtype=jnp.float32)
    seed_info = jax.random.uniform(ks, (B, C), dtype=jnp.float32)
    ent_mask = (jax.random.uniform(km, (B, C)) > 0.2).astype(jnp.float32)

    # nn.Linear(4H, H, bias=False) default init: U(-1/sqrt(4H), 1/sqrt(4H))
    bound = 1.0 / math.sqrt(4 * H)
    r_weight = jax.random.uniform(kr, (H, 4 * H), minval=-bound, maxval=bound,
                                  dtype=jnp.float32)
    g_weight = jax.random.uniform(kg, (H, 4 * H), minval=-bound, maxval=bound,
                                  dtype=jnp.float32)

    # Plain-JAX reference (mirrors the value returned by the PyTorch forward).
    def ref_fwd(qn, ee, si):
        y = jnp.einsum('bc,bch->bh', si, ee)
        z = jnp.concatenate([qn, y, qn - y, qn * y], axis=-1)
        r = jnp.tanh(z @ r_weight.T)
        g = jax.nn.sigmoid(z @ g_weight.T)
        return g * r + (1.0 - g) * qn

    # 1) Explicit small tile -> several pipelined grid steps at this toy size.
    out = query_reform(q_node, ent_emb, seed_info, ent_mask,
                       r_weight, g_weight, batch_tile=16)
    out = jax.block_until_ready(out)
    ref = ref_fwd(q_node, ent_emb, seed_info)
    assert out.shape == (B, H) and out.dtype == q_node.dtype
    assert jnp.allclose(out, ref, atol=1e-4, rtol=1e-4)

    # 2) Auto-tiled run with a ragged batch (B % 8 != 0 -> padded tail path).
    Br = 12
    out_r = query_reform(q_node[:Br], ent_emb[:Br], seed_info[:Br],
                         ent_mask[:Br], r_weight, g_weight)
    out_r = jax.block_until_ready(out_r)
    ref_r = ref_fwd(q_node[:Br], ent_emb[:Br], seed_info[:Br])
    assert out_r.shape == (Br, H)
    assert jnp.allclose(out_r, ref_r, atol=1e-4, rtol=1e-4)

    print("KERNEL_OK")
</pallas_src>

<mosaic_0001>
module attributes {stable_mosaic.version = 11 : i64} {
  func.func @_query_reform_kernel(%arg0: i32, %arg1: memref<16x128xf32, #tpu.memory_space<vmem>>, %arg2: memref<16x16x128xf32, #tpu.memory_space<vmem>>, %arg3: memref<16x16x1xf32, #tpu.memory_space<vmem>>, %arg4: memref<384x256xf32, #tpu.memory_space<vmem>>, %arg5: memref<16x128xf32, #tpu.memory_space<vmem>>) attributes {dimension_semantics = [#tpu.dimension_semantics<parallel>], iteration_bounds = array<i64: 4>, scalar_prefetch = 0 : i64, scratch_operands = 0 : i64, tpu.core_type = #tpu.core_type<tc>, window_params = [{transform_indices = @transform_0, window_bounds = array<i64: 16, 128>}, {transform_indices = @transform_1, window_bounds = array<i64: 16, 16, 128>}, {transform_indices = @transform_2, window_bounds = array<i64: 16, 16, 1>}, {pipeline_mode = #tpu.pipeline_mode<synchronous>, transform_indices = @transform_3, window_bounds = array<i64: 384, 256>}, {transform_indices = @transform_4, window_bounds = array<i64: 16, 128>}]} {
    %c0 = arith.constant 0 : index
    %c0_0 = arith.constant 0 : index
    %0 = vector.load %arg1[%c0, %c0_0] : memref<16x128xf32, #tpu.memory_space<vmem>>, vector<16x128xf32>
    %c0_1 = arith.constant 0 : index
    %c0_2 = arith.constant 0 : index
    %c0_3 = arith.constant 0 : index
    %1 = vector.load %arg3[%c0_1, %c0_2, %c0_3] : memref<16x16x1xf32, #tpu.memory_space<vmem>>, vector<16x16x1xf32>
    %c0_4 = arith.constant 0 : index
    %c0_5 = arith.constant 0 : index
    %c0_6 = arith.constant 0 : index
    %2 = vector.load %arg2[%c0_4, %c0_5, %c0_6] : memref<16x16x128xf32, #tpu.memory_space<vmem>>, vector<16x16x128xf32>
    %3 = vector.broadcast %1 : vector<16x16x1xf32> to vector<16x16x128xf32>
    %4 = arith.mulf %3, %2 : vector<16x16x128xf32>
    %cst = arith.constant dense<0.000000e+00> : vector<16x128xf32>
    %5 = vector.multi_reduction <add>, %4, %cst [1] : vector<16x16x128xf32> to vector<16x128xf32>
    %6 = arith.mulf %0, %5 : vector<16x128xf32>
    %7 = tpu.concatenate %0, %5, %6 in 1 : vector<16x128xf32>, vector<16x128xf32>, vector<16x128xf32> -> vector<16x384xf32>
    %c0_7 = arith.constant 0 : index
    %c0_8 = arith.constant 0 : index
    %8 = vector.load %arg4[%c0_7, %c0_8] : memref<384x256xf32, #tpu.memory_space<vmem>>, vector<384x256xf32>
    %cst_9 = arith.constant dense<0.000000e+00> : vector<16x256xf32>
    %9 = tpu.matmul %7, %8, %cst_9 {dimension_numbers = #tpu.dot_dimension_numbers<[1], [0], [0], [1], [0, 0, 1, 1], [], []>} : vector<16x384xf32>, vector<384x256xf32>, vector<16x256xf32> -> vector<16x256xf32>
    %10 = vector.extract_strided_slice %9 {offsets = [0, 0], sizes = [16, 128], strides = [1, 1]} : vector<16x256xf32> to vector<16x128xf32>
    %11 = math.tanh %10 : vector<16x128xf32>
    %12 = vector.extract_strided_slice %9 {offsets = [0, 128], sizes = [16, 128], strides = [1, 1]} : vector<16x256xf32> to vector<16x128xf32>
    %13 = arith.negf %12 : vector<16x128xf32>
    %14 = math.exp %13 : vector<16x128xf32>
    %cst_10 = arith.constant 1.000000e+00 : f32
    %15 = vector.broadcast %cst_10 : f32 to vector<16x128xf32>
    %16 = arith.addf %15, %14 : vector<16x128xf32>
    %17 = arith.divf %15, %16 : vector<16x128xf32>
    %18 = arith.mulf %17, %11 : vector<16x128xf32>
    %cst_11 = arith.constant 1.000000e+00 : f32
    %19 = vector.broadcast %cst_11 : f32 to vector<16x128xf32>
    %20 = arith.subf %19, %17 : vector<16x128xf32>
    %21 = arith.mulf %20, %0 : vector<16x128xf32>
    %22 = arith.addf %18, %21 : vector<16x128xf32>
    %c0_12 = arith.constant 0 : index
    %c0_13 = arith.constant 0 : index
    %23 = vector.load %arg5[%c0_12, %c0_13] : memref<16x128xf32, #tpu.memory_space<vmem>>, vector<16x128xf32>
    tpu.vector_store %arg5[%c0_12, %c0_13], %22 {strides = array<i32>} : memref<16x128xf32, #tpu.memory_space<vmem>>, vector<16x128xf32>,
    return
  }
  func.func @transform_0(%arg0: i32) -> (i32, i32) {
    %c0_i32 = arith.constant 0 : i32
    %c0_i32_0 = arith.constant 0 : i32
    return %arg0, %c0_i32 : i32, i32
  }
  func.func @transform_1(%arg0: i32) -> (i32, i32, i32) {
    %c0_i32 = arith.constant 0 : i32
    %c0_i32_0 = arith.constant 0 : i32
    %c0_i32_1 = arith.constant 0 : i32
    return %arg0, %c0_i32, %c0_i32_0 : i32, i32, i32
  }
  func.func @transform_2(%arg0: i32) -> (i32, i32, i32) {
    %c0_i32 = arith.constant 0 : i32
    %c0_i32_0 = arith.constant 0 : i32
    %c0_i32_1 = arith.constant 0 : i32
    return %arg0, %c0_i32, %c0_i32_0 : i32, i32, i32
  }
  func.func @transform_3(%arg0: i32) -> (i32, i32) {
    %c0_i32 = arith.constant 0 : i32
    %c0_i32_0 = arith.constant 0 : i32
    %c0_i32_1 = arith.constant 0 : i32
    return %c0_i32, %c0_i32_0 : i32, i32
  }
  func.func @transform_4(%arg0: i32) -> (i32, i32) {
    %c0_i32 = arith.constant 0 : i32
    %c0_i32_0 = arith.constant 0 : i32
    return %arg0, %c0_i32 : i32, i32
  }
}

module attributes {stable_mosaic.version = 11 : i64} {
  func.func @_query_reform_kernel(%arg0: i32, %arg1: memref<16x128xf32, #tpu.memory_space<vmem>>, %arg2: memref<16x16x128xf32, #tpu.memory_space<vmem>>, %arg3: memref<16x16x1xf32, #tpu.memory_space<vmem>>, %arg4: memref<384x256xf32, #tpu.memory_space<vmem>>, %arg5: memref<16x128xf32, #tpu.memory_space<vmem>>) attributes {dimension_semantics = [#tpu.dimension_semantics<parallel>], iteration_bounds = array<i64: 4>, scalar_prefetch = 0 : i64, scratch_operands = 0 : i64, tpu.core_type = #tpu.core_type<tc>, window_params = [{transform_indices = @transform_0, window_bounds = array<i64: 16, 128>}, {transform_indices = @transform_1, window_bounds = array<i64: 16, 16, 128>}, {transform_indices = @transform_2, window_bounds = array<i64: 16, 16, 1>}, {pipeline_mode = #tpu.pipeline_mode<synchronous>, transform_indices = @transform_3, window_bounds = array<i64: 384, 256>}, {transform_indices = @transform_4, window_bounds = array<i64: 16, 128>}]} {
    %c0 = arith.constant 0 : index
    %c0_0 = arith.constant 0 : index
    %0 = vector.load %arg1[%c0, %c0_0] : memref<16x128xf32, #tpu.memory_space<vmem>>, vector<16x128xf32>
    %c0_1 = arith.constant 0 : index
    %c0_2 = arith.constant 0 : index
    %c0_3 = arith.constant 0 : index
    %1 = vector.load %arg3[%c0_1, %c0_2, %c0_3] : memref<16x16x1xf32, #tpu.memory_space<vmem>>, vector<16x16x1xf32>
    %c0_4 = arith.constant 0 : index
    %c0_5 = arith.constant 0 : index
    %c0_6 = arith.constant 0 : index
    %2 = vector.load %arg2[%c0_4, %c0_5, %c0_6] : memref<16x16x128xf32, #tpu.memory_space<vmem>>, vector<16x16x128xf32>
    %3 = vector.broadcast %1 : vector<16x16x1xf32> to vector<16x16x128xf32>
    %4 = arith.mulf %3, %2 : vector<16x16x128xf32>
    %cst = arith.constant dense<0.000000e+00> : vector<16x128xf32>
    %5 = vector.multi_reduction <add>, %4, %cst [1] : vector<16x16x128xf32> to vector<16x128xf32>
    %6 = arith.mulf %0, %5 : vector<16x128xf32>
    %7 = tpu.concatenate %0, %5, %6 in 1 : vector<16x128xf32>, vector<16x128xf32>, vector<16x128xf32> -> vector<16x384xf32>
    %c0_7 = arith.constant 0 : index
    %c0_8 = arith.constant 0 : index
    %8 = vector.load %arg4[%c0_7, %c0_8] : memref<384x256xf32, #tpu.memory_space<vmem>>, vector<384x256xf32>
    %cst_9 = arith.constant dense<0.000000e+00> : vector<16x256xf32>
    %9 = tpu.matmul %7, %8, %cst_9 {dimension_numbers = #tpu.dot_dimension_numbers<[1], [0], [0], [1], [0, 0, 1, 1], [], []>} : vector<16x384xf32>, vector<384x256xf32>, vector<16x256xf32> -> vector<16x256xf32>
    %10 = vector.extract_strided_slice %9 {offsets = [0, 0], sizes = [16, 128], strides = [1, 1]} : vector<16x256xf32> to vector<16x128xf32>
    %11 = math.tanh %10 : vector<16x128xf32>
    %12 = vector.extract_strided_slice %9 {offsets = [0, 128], sizes = [16, 128], strides = [1, 1]} : vector<16x256xf32> to vector<16x128xf32>
    %13 = arith.negf %12 : vector<16x128xf32>
    %14 = math.exp %13 : vector<16x128xf32>
    %cst_10 = arith.constant 1.000000e+00 : f32
    %15 = vector.broadcast %cst_10 : f32 to vector<16x128xf32>
    %16 = arith.addf %15, %14 : vector<16x128xf32>
    %17 = arith.divf %15, %16 : vector<16x128xf32>
    %18 = arith.mulf %17, %11 : vector<16x128xf32>
    %cst_11 = arith.constant 1.000000e+00 : f32
    %19 = vector.broadcast %cst_11 : f32 to vector<16x128xf32>
    %20 = arith.subf %19, %17 : vector<16x128xf32>
    %21 = arith.mulf %20, %0 : vector<16x128xf32>
    %22 = arith.addf %18, %21 : vector<16x128xf32>
    %c0_12 = arith.constant 0 : index
    %c0_13 = arith.constant 0 : index
    %23 = vector.load %arg5[%c0_12, %c0_13] : memref<16x128xf32, #tpu.memory_space<vmem>>, vector<16x128xf32>
    tpu.vector_store %arg5[%c0_12, %c0_13], %22 {strides = array<i32>} : memref<16x128xf32, #tpu.memory_space<vmem>>, vector<16x128xf32>,
    return
  }
  func.func @transform_0(%arg0: i32) -> (i32, i32) {
    %c0_i32 = arith.constant 0 : i32
    %c0_i32_0 = arith.constant 0 : i32
    return %arg0, %c0_i32 : i32, i32
  }
  func.func @transform_1(%arg0: i32) -> (i32, i32, i32) {
    %c0_i32 = arith.constant 0 : i32
    %c0_i32_0 = arith.constant 0 : i32
    %c0_i32_1 = arith.constant 0 : i32
    return %arg0, %c0_i32, %c0_i32_0 : i32, i32, i32
  }
  func.func @transform_2(%arg0: i32) -> (i32, i32, i32) {
    %c0_i32 = arith.constant 0 : i32
    %c0_i32_0 = arith.constant 0 : i32
    %c0_i32_1 = arith.constant 0 : i32
    return %arg0, %c0_i32, %c0_i32_0 : i32, i32, i32
  }
  func.func @transform_3(%arg0: i32) -> (i32, i32) {
    %c0_i32 = arith.constant 0 : i32
    %c0_i32_0 = arith.constant 0 : i32
    %c0_i32_1 = arith.constant 0 : i32
    return %c0_i32, %c0_i32_0 : i32, i32
  }
  func.func @transform_4(%arg0: i32) -> (i32, i32) {
    %c0_i32 = arith.constant 0 : i32
    %c0_i32_0 = arith.constant 0 : i32
    return %arg0, %c0_i32 : i32, i32
  }
}

</mosaic_0001>

<llo_original>
// kernel: tpu_custom_call.1
$region0: #{tpu_custom_call.1}
  #allocation0 [shape = 'u32[]', space=smem, size = 0x4, offset = 0x4, fixed_abs, tag = 'smem constant byte address 0x4 - core index']
  #allocation1 [shape = 'u32[72,128]{1,0:T(1,128)}', space=vmem, size = 0x9000, scoped, tag = 'internal scratch']
  %s0 = inlined_call_operand.hbm [shape: f32[64,128], index: 0, kind: input, shape index: {}]
  %s1 = inlined_call_operand.vmem [shape: f32[64,16,128], index: 1, kind: input, shape index: {}]
  %s2 = inlined_call_operand.vmem [shape: f32[64,16,1], index: 2, kind: input, shape index: {}]
  %s3 = inlined_call_operand.hbm [shape: f32[384,256], index: 3, kind: input, shape index: {}]
  %s4 = inlined_call_operand.hbm [shape: f32[64,128], index: 4, kind: output, shape index: {}]
  %s5 = sld [smem:[#allocation0]]
  $region57: #{tpu_custom_call.1} parent=0
    _
  %s7 = ssub.s32 1, %s5
  %s8 = scalar_select 0, %s7, %s5
  $region1: #{tpu_custom_call.1} parent=0
    #allocation2 [shape = 'u8[16384]{0}', space=vmem, size = 0x4000, scoped, tag = 'input window, operand 0']
    #allocation3 [shape = 's32[2]{0}', space=sflag, size = 0x8, scoped, tag = 'scoped memory for tpu_custom_call.1']
    #allocation4 [shape = 's32[2]{0}', space=sflag, size = 0x8, scoped, tag = 'scoped memory for tpu_custom_call.1']
    #allocation5 [shape = 'u8[393216]{0}', space=vmem, size = 0x60000, scoped, tag = 'input window, operand 3, single buffered']
    #allocation6 [shape = 's32[1]{0}', space=sflag, size = 0x4, scoped, tag = 'scoped memory for tpu_custom_call.1']
    #allocation7 [shape = 'u8[16384]{0}', space=vmem, size = 0x4000, scoped, tag = 'output window, operand 0']
    %9 = vsyncpa [#allocation3], 0
    %s10 = scalar_lea.sflag [#allocation3], 1
    %11 = vsyncpa %s10, 0
    %12 = vsyncpa [#allocation6], 0
    %13 = vsyncpa [#allocation4], 0
    %s14 = scalar_lea.sflag [#allocation4], 1
    %15 = vsyncpa %s14, 0
    loop: start=0, step=1, limit=6
    $region2: #{tpu_custom_call.1} parent=1 // loop_pre_header
      _
    $region3: #{tpu_custom_call.1} parent=1 // loop_header
      %s17 = sphi 0, %s21
      %p18 = scmp.ge.s32.totalorder %s17, 6
      %s27 = sphi 0, %s29
      %s30 = sphi 0, %s27
      %s31 = sphi 0, %s30
      %s47 = sphi 0, %s31
      %s53 = sphi 0, %s55
      %s56 = sphi 0, %s53
      %s57 = sphi 0, %s56
      %s73 = sphi 0, %s57
      %s79 = sphi 0, %s81
      %s82 = sphi 0, %s79
      %s83 = sphi 0, %s82
      %s99 = sphi 0, %s83
      %s103 = sphi 0, %s103
      %s105 = sphi 0, %s103
      %s106 = sphi 0, %s105
      %s120 = sphi 0, %s106
      %s126 = sphi 0, %s128
      %s129 = sphi 0, %s126
      %s130 = sphi 0, %s129
      %s146 = sphi 0, %s130
    $region4: #{tpu_custom_call.1} parent=1 // loop_header_branch
      %20 = sbr.rel (%p18) target = $region8
    $region5: #{tpu_custom_call.1} parent=1 // loop_body
      %s22 = ssub.s32 %s17, 1
      %s23 = ssub.s32 %s17, 2
      %s24 = sadd.s32 %s17, 1
      %s25 = ssub.s32 %s17, %s24
      %p26 = scmp.eq.s32.totalorder %s25, 0
      %s28 = sadd.s32 %s27, 1
      %s29 = scalar_select %p26, %s27, %s28
      %p32 = pneg %p26
      %p33 = scmp.eq.s32.totalorder %s17, 3
      %p34 = por %p32, %p33
      %p35 = scmp.ne.s32.totalorder %s27, %s30
      %p36 = scmp.eq.s32.totalorder %s17, 0
      %p37 = por %p35, %p36
      %p38 = scmp.ne.s32.totalorder %s27, %s30
      %p39 = scmp.eq.s32.totalorder %s22, 3
      %p40 = por %p38, %p39
      %p41 = scmp.ne.s32.totalorder %s30, %s31
      %p42 = scmp.eq.s32.totalorder %s22, 0
      %p43 = por %p41, %p42
      %p44 = scmp.ne.s32.totalorder %s30, %s31
      %p45 = scmp.eq.s32.totalorder %s23, 3
      %p46 = por %p44, %p45
      %p48 = scmp.ne.s32.totalorder %s31, %s47
      %p49 = scmp.eq.s32.totalorder %s23, 0
      %p50 = por %p48, %p49
      %s51 = ssub.s32 %s17, %s24
      %p52 = scmp.eq.s32.totalorder %s51, 0
      %s54 = sadd.s32 %s53, 1
      %s55 = scalar_select %p52, %s53, %s54
      %p58 = pneg %p52
      %p59 = scmp.eq.s32.totalorder %s17, 3
      %p60 = por %p58, %p59
      %p61 = scmp.ne.s32.totalorder %s53, %s56
      %p62 = scmp.eq.s32.totalorder %s17, 0
      %p63 = por %p61, %p62
      %p64 = scmp.ne.s32.totalorder %s53, %s56
      %p65 = scmp.eq.s32.totalorder %s22, 3
      %p66 = por %p64, %p65
      %p67 = scmp.ne.s32.totalorder %s56, %s57
      %p68 = scmp.eq.s32.totalorder %s22, 0
      %p69 = por %p67, %p68
      %p70 = scmp.ne.s32.totalorder %s56, %s57
      %p71 = scmp.eq.s32.totalorder %s23, 3
      %p72 = por %p70, %p71
      %p74 = scmp.ne.s32.totalorder %s57, %s73
      %p75 = scmp.eq.s32.totalorder %s23, 0
      %p76 = por %p74, %p75
      %s77 = ssub.s32 %s17, %s24
      %p78 = scmp.eq.s32.totalorder %s77, 0
      %s80 = sadd.s32 %s79, 1
      %s81 = scalar_select %p78, %s79, %s80
      %p84 = pneg %p78
      %p85 = scmp.eq.s32.totalorder %s17, 3
      %p86 = por %p84, %p85
      %p87 = scmp.ne.s32.totalorder %s79, %s82
      %p88 = scmp.eq.s32.totalorder %s17, 0
      %p89 = por %p87, %p88
      %p90 = scmp.ne.s32.totalorder %s79, %s82
      %p91 = scmp.eq.s32.totalorder %s22, 3
      %p92 = por %p90, %p91
      %p93 = scmp.ne.s32.totalorder %s82, %s83
      %p94 = scmp.eq.s32.totalorder %s22, 0
      %p95 = por %p93, %p94
      %p96 = scmp.ne.s32.totalorder %s82, %s83
      %p97 = scmp.eq.s32.totalorder %s23, 3
      %p98 = por %p96, %p97
      %p100 = scmp.ne.s32.totalorder %s83, %s99
      %p101 = scmp.eq.s32.totalorder %s23, 0
      %p102 = por %p100, %p101
      %s104 = sadd.s32 %s103, 1
      %p107 = scmp.eq.s32.totalorder %s17, 3
      %p108 = scmp.ne.s32.totalorder %s103, %s105
      %p109 = scmp.eq.s32.totalorder %s17, 0
      %p110 = por %p108, %p109
      %p111 = scmp.ne.s32.totalorder %s103, %s105
      %p112 = scmp.eq.s32.totalorder %s22, 3
      %p113 = por %p111, %p112
      %p114 = scmp.ne.s32.totalorder %s105, %s106
      %p115 = scmp.eq.s32.totalorder %s22, 0
      %p116 = por %p114, %p115
      %p117 = scmp.ne.s32.totalorder %s105, %s106
      %p118 = scmp.eq.s32.totalorder %s23, 3
      %p119 = por %p117, %p118
      %p121 = scmp.ne.s32.totalorder %s106, %s120
      %p122 = scmp.eq.s32.totalorder %s23, 0
      %p123 = por %p121, %p122
      %s124 = ssub.s32 %s17, %s24
      %p125 = scmp.eq.s32.totalorder %s124, 0
      %s127 = sadd.s32 %s126, 1
      %s128 = scalar_select %p125, %s126, %s127
      %p131 = pneg %p125
      %p132 = scmp.eq.s32.totalorder %s17, 3
      %p133 = por %p131, %p132
      %p134 = scmp.ne.s32.totalorder %s126, %s129
      %p135 = scmp.eq.s32.totalorder %s17, 0
      %p136 = por %p134, %p135
      %p137 = scmp.ne.s32.totalorder %s126, %s129
      %p138 = scmp.eq.s32.totalorder %s22, 3
      %p139 = por %p137, %p138
      %p140 = scmp.ne.s32.totalorder %s129, %s130
      %p141 = scmp.eq.s32.totalorder %s22, 0
      %p142 = por %p140, %p141
      %p143 = scmp.ne.s32.totalorder %s129, %s130
      %p144 = scmp.eq.s32.totalorder %s23, 3
      %p145 = por %p143, %p144
      %p147 = scmp.ne.s32.totalorder %s130, %s146
      %p148 = scmp.eq.s32.totalorder %s23, 0
      %p149 = por %p147, %p148
      %p150 = scmp.le.s32.totalorder 1, %s17
      %p151 = scmp.lt.s32.totalorder %s17, 5
      %p152 = pnand %p150, %p151
      %p153 = pneg %p152
      // Predicated region
      $region9: #{tpu_custom_call.1} parent=5 // pred_check
        _
      $region10: #{tpu_custom_call.1} parent=5 // pred_check_branch
        %155 = sbr.rel (%p152) target = $region12
      $region11: #{tpu_custom_call.1} parent=5 // pred_region
        %s156 = ssub.s32 %s17, 1
        // Predicated region
        $region13: #{tpu_custom_call.1} parent=11 // pred_check
          %p157 = pneg %p116
        $region14: #{tpu_custom_call.1} parent=11 // pred_check_branch
          %159 = sbr.rel (%p157) target = $region16
        $region15: #{tpu_custom_call.1} parent=11 // pred_region
          %161 = vsyncadd [#allocation6], 0
          %s162 = sshll.u32 %s3, 4
          %s163 = int_to_ptr.hbm [resolvable:$true] %s162
          %s164 = sshll.u32 [#allocation5], 4
          %s165 = int_to_ptr.vmem [resolvable:$true] %s164
          %170 = dma.hbm_to_vmem [thread:$0]  %s163, 12288, %s165, [#allocation6], 256, 256, 16
        $region16: #{tpu_custom_call.1} parent=11 // pred_fallthru
          _
      $region12: #{tpu_custom_call.1} parent=5 // pred_fallthru
        _
      %p171 = scmp.lt.s32.totalorder %s17, 4
      // Predicated region
      $region17: #{tpu_custom_call.1} parent=5 // pred_check
        %p172 = pneg %p171
      $region18: #{tpu_custom_call.1} parent=5 // pred_check_branch
        %174 = sbr.rel (%p172) target = $region20
      $region19: #{tpu_custom_call.1} parent=5 // pred_region
        // Predicated region
        $region21: #{tpu_custom_call.1} parent=19 // pred_check
          %p175 = pneg %p37
        $region22: #{tpu_custom_call.1} parent=19 // pred_check_branch
          %177 = sbr.rel (%p175) target = $region24
        $region23: #{tpu_custom_call.1} parent=19 // pred_region
          %s178 = sand.u32 %s27, 1
          %s179 = scalar_lea.sflag [#allocation3], %s178
          %s180 = sand.u32 %s27, 1
          %s181 = smul.addr %s180, 16
          %s182 = scalar_lea.vmem [#allocation2], %s181
          %s183 = smul.u32 2, %s17
          %185 = vsyncadd %s179, 0
          %s186 = smul.addr %s183, 8
          %s187 = scalar_lea.hbm %s0, %s186
          %s188 = sshll.u32 %s187, 4
          %s189 = int_to_ptr.hbm [resolvable:$true] %s188
          %s190 = sshll.u32 %s182, 4
          %s191 = int_to_ptr.vmem [resolvable:$true] %s190
          %196 = dma.hbm_to_vmem [thread:$0]  %s189, 256, %s191, %s179, 128, 128, 8
        $region24: #{tpu_custom_call.1} parent=19 // pred_fallthru
          _
        // Predicated region
        $region25: #{tpu_custom_call.1} parent=19 // pred_check
          %p197 = pneg %p63
        $region26: #{tpu_custom_call.1} parent=19 // pred_check_branch
          %199 = sbr.rel (%p197) target = $region28
        $region27: #{tpu_custom_call.1} parent=19 // pred_region
          %s200 = smul.u32 16, %s17
          %p201 = scmp.lt.s32.totalorder %s200, 63
          %s202 = scalar_select %p201, %s200, 63
          %s203 = smul.addr %s202, 2
          %s204 = smul.addr %s203, 8
          %s205 = scalar_lea.vmem %s1, %s204
          %s206 = smul.u32 16, %s17
        $region28: #{tpu_custom_call.1} parent=19 // pred_fallthru
          _
        // Predicated region
        $region29: #{tpu_custom_call.1} parent=19 // pred_check
          %p207 = pneg %p89
        $region30: #{tpu_custom_call.1} parent=19 // pred_check_branch
          %209 = sbr.rel (%p207) target = $region32
        $region31: #{tpu_custom_call.1} parent=19 // pred_region
          %s210 = smul.u32 16, %s17
          %p211 = scmp.lt.s32.totalorder %s210, 63
          %s212 = scalar_select %p211, %s210, 63
          %s213 = smul.addr %s212, 2
          %s214 = smul.addr %s213, 8
          %s215 = scalar_lea.vmem %s2, %s214
          %s216 = smul.u32 16, %s17
        $region32: #{tpu_custom_call.1} parent=19 // pred_fallthru
          _
      $region20: #{tpu_custom_call.1} parent=5 // pred_fallthru
        _
      %p217 = scmp.le.s32.totalorder 1, %s17
      %p218 = scmp.lt.s32.totalorder %s17, 5
      %p219 = pnand %p217, %p218
      %p220 = pneg %p219
      // Predicated region
      $region33: #{tpu_custom_call.1} parent=5 // pred_check
        _
      $region34: #{tpu_custom_call.1} parent=5 // pred_check_branch
        %222 = sbr.rel (%p219) target = $region36
      $region35: #{tpu_custom_call.1} parent=5 // pred_region
        %s223 = ssub.s32 %s17, 1
        %s224 = sand.u32 %s30, 1
        %s225 = scalar_lea.sflag [#allocation3], %s224
        %s226 = sand.u32 %s30, 1
        %s227 = smul.addr %s226, 16
        %s228 = scalar_lea.vmem [#allocation2], %s227
        // Predicated region
        $region37: #{tpu_custom_call.1} parent=35 // pred_check
          %p229 = pneg %p43
        $region38: #{tpu_custom_call.1} parent=35 // pred_check_branch
          %231 = sbr.rel (%p229) target = $region40
        $region39: #{tpu_custom_call.1} parent=35 // pred_region
          %233 = dma.done %s225, 256
        $region40: #{tpu_custom_call.1} parent=35 // pred_fallthru
          _
        // Predicated region
        $region41: #{tpu_custom_call.1} parent=35 // pred_check
          %p234 = pneg %p116
        $region42: #{tpu_custom_call.1} parent=35 // pred_check_branch
          %236 = sbr.rel (%p234) target = $region44
        $region43: #{tpu_custom_call.1} parent=35 // pred_region
          %238 = dma.done [#allocation6], 12288
        $region44: #{tpu_custom_call.1} parent=35 // pred_fallthru
          _
        %s239 = sand.u32 %s30, 1
        %s240 = scalar_lea.sflag [#allocation3], %s239
        %s241 = sand.u32 %s30, 1
        %s242 = smul.addr %s241, 16
        %s243 = scalar_lea.vmem [#allocation2], %s242
        %p244 = pneg %p43
        %p245 = pneg %p40
        %s246 = smul.u32 16, %s22
        %p247 = scmp.lt.s32.totalorder %s246, 63
        %s248 = scalar_select %p247, %s246, 63
        %s249 = smul.addr %s248, 2
        %s250 = smul.addr %s249, 8
        %s251 = scalar_lea.vmem %s1, %s250
        %p252 = pneg %p69
        %p253 = pneg %p66
        %s254 = smul.u32 16, %s22
        %p255 = scmp.lt.s32.totalorder %s254, 63
        %s256 = scalar_select %p255, %s254, 63
        %s257 = smul.addr %s256, 2
        %s258 = smul.addr %s257, 8
        %s259 = scalar_lea.vmem %s2, %s258
        %p260 = pneg %p95
        %p261 = pneg %p92
        %p262 = pneg %p116
        %p263 = pneg %p113
        %p264 = pneg %p142
        %p265 = pneg %p139
        %s266 = sand.u32 %s129, 1
        %s267 = scalar_lea.sflag [#allocation4], %s266
        %s268 = sand.u32 %s129, 1
        %s269 = smul.addr %s268, 16
        %s270 = scalar_lea.vmem [#allocation7], %s269
        %s271 = smul.u32 2, %s22
        %s272 = smul.u32 16, %s22
        %p273 = scmp.lt.s32.totalorder %s272, 63
        %s274 = scalar_select %p273, %s272, 63
        %s275 = smul.addr %s274, 2
        %s276 = smul.addr %s275, 8
        %s277 = scalar_lea.vmem %s1, %s276
        %s278 = smul.u32 16, %s22
        %s279 = smul.u32 16, %s22
        %p280 = scmp.lt.s32.totalorder %s279, 63
        %s281 = scalar_select %p280, %s279, 63
        %s282 = smul.addr %s281, 2
        %s283 = smul.addr %s282, 8
        %s284 = scalar_lea.vmem %s2, %s283
        %s285 = smul.u32 16, %s22
        %s286 = smul.u32 2, %s22
        %v287 = vld [vmem:[%s228] sm:$0xff]
        %v288 = vld [vmem:[%s228 + $0x8] sm:$0xff]
        %v289 = vld [vmem:[%s284] sm:$0xff]
        %v290 = vld [vmem:[%s284 + $0x8] sm:$0xff]
        %v291 = vld [vmem:[%s284 + $0x10] sm:$0xff]
        %v292 = vld [vmem:[%s284 + $0x18] sm:$0xff]
        %v293 = vld [vmem:[%s284 + $0x20] sm:$0xff]
        %v294 = vld [vmem:[%s284 + $0x28] sm:$0xff]
        %v295 = vld [vmem:[%s284 + $0x30] sm:$0xff]
        %v296 = vld [vmem:[%s284 + $0x38] sm:$0xff]
        %v297 = vld [vmem:[%s284 + $0x40] sm:$0xff]
        %v298 = vld [vmem:[%s284 + $0x48] sm:$0xff]
        %v299 = vld [vmem:[%s284 + $0x50] sm:$0xff]
        %v300 = vld [vmem:[%s284 + $0x58] sm:$0xff]
        %v301 = vld [vmem:[%s284 + $0x60] sm:$0xff]
        %v302 = vld [vmem:[%s284 + $0x68] sm:$0xff]
        %v303 = vld [vmem:[%s284 + $0x70] sm:$0xff]
        %v304 = vld [vmem:[%s284 + $0x78] sm:$0xff]
        %v305 = vld [vmem:[%s284 + $0x80] sm:$0xff]
        %v306 = vld [vmem:[%s284 + $0x88] sm:$0xff]
        %v307 = vld [vmem:[%s284 + $0x90] sm:$0xff]
        %v308 = vld [vmem:[%s284 + $0x98] sm:$0xff]
        %v309 = vld [vmem:[%s284 + $0xa0] sm:$0xff]
        %v310 = vld [vmem:[%s284 + $0xa8] sm:$0xff]
        %v311 = vld [vmem:[%s284 + $0xb0] sm:$0xff]
        %v312 = vld [vmem:[%s284 + $0xb8] sm:$0xff]
        %v313 = vld [vmem:[%s284 + $0xc0] sm:$0xff]
        %v314 = vld [vmem:[%s284 + $0xc8] sm:$0xff]
        %v315 = vld [vmem:[%s284 + $0xd0] sm:$0xff]
        %v316 = vld [vmem:[%s284 + $0xd8] sm:$0xff]
        %v317 = vld [vmem:[%s284 + $0xe0] sm:$0xff]
        %v318 = vld [vmem:[%s284 + $0xe8] sm:$0xff]
        %v319 = vld [vmem:[%s284 + $0xf0] sm:$0xff]
        %v320 = vld [vmem:[%s284 + $0xf8] sm:$0xff]
        %v321 = vld [vmem:[%s277] sm:$0xff]
        %v322 = vld [vmem:[%s277 + $0x8] sm:$0xff]
        %v323 = vld [vmem:[%s277 + $0x10] sm:$0xff]
        %v324 = vld [vmem:[%s277 + $0x18] sm:$0xff]
        %v325 = vld [vmem:[%s277 + $0x20] sm:$0xff]
        %v326 = vld [vmem:[%s277 + $0x28] sm:$0xff]
        %v327 = vld [vmem:[%s277 + $0x30] sm:$0xff]
        %v328 = vld [vmem:[%s277 + $0x38] sm:$0xff]
        %v329 = vld [vmem:[%s277 + $0x40] sm:$0xff]
        %v330 = vld [vmem:[%s277 + $0x48] sm:$0xff]
        %v331 = vld [vmem:[%s277 + $0x50] sm:$0xff]
        %v332 = vld [vmem:[%s277 + $0x58] sm:$0xff]
        %v333 = vld [vmem:[%s277 + $0x60] sm:$0xff]
        %v334 = vld [vmem:[%s277 + $0x68] sm:$0xff]
        %v335 = vld [vmem:[%s277 + $0x70] sm:$0xff]
        %v336 = vld [vmem:[%s277 + $0x78] sm:$0xff]
        %v337 = vld [vmem:[%s277 + $0x80] sm:$0xff]
        %v338 = vld [vmem:[%s277 + $0x88] sm:$0xff]
        %v339 = vld [vmem:[%s277 + $0x90] sm:$0xff]
        %v340 = vld [vmem:[%s277 + $0x98] sm:$0xff]
        %v341 = vld [vmem:[%s277 + $0xa0] sm:$0xff]
        %v342 = vld [vmem:[%s277 + $0xa8] sm:$0xff]
        %v343 = vld [vmem:[%s277 + $0xb0] sm:$0xff]
        %v344 = vld [vmem:[%s277 + $0xb8] sm:$0xff]
        %v345 = vld [vmem:[%s277 + $0xc0] sm:$0xff]
        %v346 = vld [vmem:[%s277 + $0xc8] sm:$0xff]
        %v347 = vld [vmem:[%s277 + $0xd0] sm:$0xff]
        %v348 = vld [vmem:[%s277 + $0xd8] sm:$0xff]
        %v349 = vld [vmem:[%s277 + $0xe0] sm:$0xff]
        %v350 = vld [vmem:[%s277 + $0xe8] sm:$0xff]
        %v351 = vld [vmem:[%s277 + $0xf0] sm:$0xff]
        %v352 = vld [vmem:[%s277 + $0xf8] sm:$0xff]
        %354 = vset.pattern.permute.xlu0 0
        %355 = vperm.xlu0 %354, %v289
        %v356 = vpop.permute.xlu0 %355
        %359 = vset.pattern.permute.xlu0 0
        %360 = vperm.xlu0 %359, %v290
        %v361 = vpop.permute.xlu0 %360
        %364 = vset.pattern.permute.xlu0 0
        %365 = vperm.xlu0 %364, %v291
        %v366 = vpop.permute.xlu0 %365
        %369 = vset.pattern.permute.xlu0 0
        %370 = vperm.xlu0 %369, %v292
        %v371 = vpop.permute.xlu0 %370
        %374 = vset.pattern.permute.xlu0 0
        %375 = vperm.xlu0 %374, %v293
        %v376 = vpop.permute.xlu0 %375
        %379 = vset.pattern.permute.xlu0 0
        %380 = vperm.xlu0 %379, %v294
        %v381 = vpop.permute.xlu0 %380
        %384 = vset.pattern.permute.xlu0 0
        %385 = vperm.xlu0 %384, %v295
        %v386 = vpop.permute.xlu0 %385
        %389 = vset.pattern.permute.xlu0 0
        %390 = vperm.xlu0 %389, %v296
        %v391 = vpop.permute.xlu0 %390
        %394 = vset.pattern.permute.xlu0 0
        %395 = vperm.xlu0 %394, %v297
        %v396 = vpop.permute.xlu0 %395
        %399 = vset.pattern.permute.xlu0 0
        %400 = vperm.xlu0 %399, %v298
        %v401 = vpop.permute.xlu0 %400
        %404 = vset.pattern.permute.xlu0 0
        %405 = vperm.xlu0 %404, %v299
        %v406 = vpop.permute.xlu0 %405
        %409 = vset.pattern.permute.xlu0 0
        %410 = vperm.xlu0 %409, %v300
        %v411 = vpop.permute.xlu0 %410
        %414 = vset.pattern.permute.xlu0 0
        %415 = vperm.xlu0 %414, %v301
        %v416 = vpop.permute.xlu0 %415
        %419 = vset.pattern.permute.xlu0 0
        %420 = vperm.xlu0 %419, %v302
        %v421 = vpop.permute.xlu0 %420
        %424 = vset.pattern.permute.xlu0 0
        %425 = vperm.xlu0 %424, %v303
        %v426 = vpop.permute.xlu0 %425
        %429 = vset.pattern.permute.xlu0 0
        %430 = vperm.xlu0 %429, %v304
        %v431 = vpop.permute.xlu0 %430
        %434 = vset.pattern.permute.xlu0 0
        %435 = vperm.xlu0 %434, %v305
        %v436 = vpop.permute.xlu0 %435
        %439 = vset.pattern.permute.xlu0 0
        %440 = vperm.xlu0 %439, %v306
        %v441 = vpop.permute.xlu0 %440
        %444 = vset.pattern.permute.xlu0 0
        %445 = vperm.xlu0 %444, %v307
        %v446 = vpop.permute.xlu0 %445
        %449 = vset.pattern.permute.xlu0 0
        %450 = vperm.xlu0 %449, %v308
        %v451 = vpop.permute.xlu0 %450
        %454 = vset.pattern.permute.xlu0 0
        %455 = vperm.xlu0 %454, %v309
        %v456 = vpop.permute.xlu0 %455
        %459 = vset.pattern.permute.xlu0 0
        %460 = vperm.xlu0 %459, %v310
        %v461 = vpop.permute.xlu0 %460
        %464 = vset.pattern.permute.xlu0 0
        %465 = vperm.xlu0 %464, %v311
        %v466 = vpop.permute.xlu0 %465
        %469 = vset.pattern.permute.xlu0 0
        %470 = vperm.xlu0 %469, %v312
        %v471 = vpop.permute.xlu0 %470
        %474 = vset.pattern.permute.xlu0 0
        %475 = vperm.xlu0 %474, %v313
        %v476 = vpop.permute.xlu0 %475
        %479 = vset.pattern.permute.xlu0 0
        %480 = vperm.xlu0 %479, %v314
        %v481 = vpop.permute.xlu0 %480
        %484 = vset.pattern.permute.xlu0 0
        %485 = vperm.xlu0 %484, %v315
        %v486 = vpop.permute.xlu0 %485
        %489 = vset.pattern.permute.xlu0 0
        %490 = vperm.xlu0 %489, %v316
        %v491 = vpop.permute.xlu0 %490
        %494 = vset.pattern.permute.xlu0 0
        %495 = vperm.xlu0 %494, %v317
        %v496 = vpop.permute.xlu0 %495
        %499 = vset.pattern.permute.xlu0 0
        %500 = vperm.xlu0 %499, %v318
        %v501 = vpop.permute.xlu0 %500
        %504 = vset.pattern.permute.xlu0 0
        %505 = vperm.xlu0 %504, %v319
        %v506 = vpop.permute.xlu0 %505
        %509 = vset.pattern.permute.xlu0 0
        %510 = vperm.xlu0 %509, %v320
        %v511 = vpop.permute.xlu0 %510
        %v513 = vmul.f32 %v356, %v321
        %v514 = vmul.f32 %v361, %v322
        %v515 = vmul.f32 %v366, %v323
        %v516 = vmul.f32 %v371, %v324
        %v517 = vmul.f32 %v376, %v325
        %v518 = vmul.f32 %v381, %v326
        %v519 = vmul.f32 %v386, %v327
        %v520 = vmul.f32 %v391, %v328
        %v521 = vmul.f32 %v396, %v329
        %v522 = vmul.f32 %v401, %v330
        %v523 = vmul.f32 %v406, %v331
        %v524 = vmul.f32 %v411, %v332
        %v525 = vmul.f32 %v416, %v333
        %v526 = vmul.f32 %v421, %v334
        %v527 = vmul.f32 %v426, %v335
        %v528 = vmul.f32 %v431, %v336
        %v529 = vmul.f32 %v436, %v337
        %v530 = vmul.f32 %v441, %v338
        %v531 = vmul.f32 %v446, %v339
        %v532 = vmul.f32 %v451, %v340
        %v533 = vmul.f32 %v456, %v341
        %v534 = vmul.f32 %v461, %v342
        %v535 = vmul.f32 %v466, %v343
        %v536 = vmul.f32 %v471, %v344
        %v537 = vmul.f32 %v476, %v345
        %v538 = vmul.f32 %v481, %v346
        %v539 = vmul.f32 %v486, %v347
        %v540 = vmul.f32 %v491, %v348
        %v541 = vmul.f32 %v496, %v349
        %v542 = vmul.f32 %v501, %v350
        %v543 = vmul.f32 %v506, %v351
        %v544 = vmul.f32 %v511, %v352
        %v545 = vadd.f32 %v513, %v514
        %v546 = vrot.slane %v545, 4
        %v547 = vadd.f32 %v545, %v546
        %v548 = vrot.slane %v547, 2
        %v549 = vadd.f32 %v547, %v548
        %v550 = vrot.slane %v549, 1
        %v551 = vadd.f32 %v549, %v550
        %v552 = vadd.f32 %v515, %v516
        %v553 = vrot.slane %v552, 4
        %v554 = vadd.f32 %v552, %v553
        %v555 = vrot.slane %v554, 2
        %v556 = vadd.f32 %v554, %v555
        %v557 = vrot.slane %v556, 1
        %v558 = vadd.f32 %v556, %v557
        %v559 = vadd.f32 %v517, %v518
        %v560 = vrot.slane %v559, 4
        %v561 = vadd.f32 %v559, %v560
        %v562 = vrot.slane %v561, 2
        %v563 = vadd.f32 %v561, %v562
        %v564 = vrot.slane %v563, 1
        %v565 = vadd.f32 %v563, %v564
        %v566 = vadd.f32 %v519, %v520
        %v567 = vrot.slane %v566, 4
        %v568 = vadd.f32 %v566, %v567
        %v569 = vrot.slane %v568, 2
        %v570 = vadd.f32 %v568, %v569
        %v571 = vrot.slane %v570, 1
        %v572 = vadd.f32 %v570, %v571
        %v573 = vadd.f32 %v521, %v522
        %v574 = vrot.slane %v573, 4
        %v575 = vadd.f32 %v573, %v574
        %v576 = vrot.slane %v575, 2
        %v577 = vadd.f32 %v575, %v576
        %v578 = vrot.slane %v577, 1
        %v579 = vadd.f32 %v577, %v578
        %v580 = vadd.f32 %v523, %v524
        %v581 = vrot.slane %v580, 4
        %v582 = vadd.f32 %v580, %v581
        %v583 = vrot.slane %v582, 2
        %v584 = vadd.f32 %v582, %v583
        %v585 = vrot.slane %v584, 1
        %v586 = vadd.f32 %v584, %v585
        %v587 = vadd.f32 %v525, %v526
        %v588 = vrot.slane %v587, 4
        %v589 = vadd.f32 %v587, %v588
        %v590 = vrot.slane %v589, 2
        %v591 = vadd.f32 %v589, %v590
        %v592 = vrot.slane %v591, 1
        %v593 = vadd.f32 %v591, %v592
        %v594 = vadd.f32 %v527, %v528
        %v595 = vrot.slane %v594, 4
        %v596 = vadd.f32 %v594, %v595
        %v597 = vrot.slane %v596, 2
        %v598 = vadd.f32 %v596, %v597
        %v599 = vrot.slane %v598, 1
        %v600 = vadd.f32 %v598, %v599
        %v601 = vadd.f32 %v529, %v530
        %v602 = vrot.slane %v601, 4
        %v603 = vadd.f32 %v601, %v602
        %v604 = vrot.slane %v603, 2
        %v605 = vadd.f32 %v603, %v604
        %v606 = vrot.slane %v605, 1
        %v607 = vadd.f32 %v605, %v606
        %v608 = vadd.f32 %v531, %v532
        %v609 = vrot.slane %v608, 4
        %v610 = vadd.f32 %v608, %v609
        %v611 = vrot.slane %v610, 2
        %v612 = vadd.f32 %v610, %v611
        %v613 = vrot.slane %v612, 1
        %v614 = vadd.f32 %v612, %v613
        %v615 = vadd.f32 %v533, %v534
        %v616 = vrot.slane %v615, 4
        %v617 = vadd.f32 %v615, %v616
        %v618 = vrot.slane %v617, 2
        %v619 = vadd.f32 %v617, %v618
        %v620 = vrot.slane %v619, 1
        %v621 = vadd.f32 %v619, %v620
        %v622 = vadd.f32 %v535, %v536
        %v623 = vrot.slane %v622, 4
        %v624 = vadd.f32 %v622, %v623
        %v625 = vrot.slane %v624, 2
        %v626 = vadd.f32 %v624, %v625
        %v627 = vrot.slane %v626, 1
        %v628 = vadd.f32 %v626, %v627
        %v629 = vadd.f32 %v537, %v538
        %v630 = vrot.slane %v629, 4
        %v631 = vadd.f32 %v629, %v630
        %v632 = vrot.slane %v631, 2
        %v633 = vadd.f32 %v631, %v632
        %v634 = vrot.slane %v633, 1
        %v635 = vadd.f32 %v633, %v634
        %v636 = vadd.f32 %v539, %v540
        %v637 = vrot.slane %v636, 4
        %v638 = vadd.f32 %v636, %v637
        %v639 = vrot.slane %v638, 2
        %v640 = vadd.f32 %v638, %v639
        %v641 = vrot.slane %v640, 1
        %v642 = vadd.f32 %v640, %v641
        %v643 = vadd.f32 %v541, %v542
        %v644 = vrot.slane %v643, 4
        %v645 = vadd.f32 %v643, %v644
        %v646 = vrot.slane %v645, 2
        %v647 = vadd.f32 %v645, %v646
        %v648 = vrot.slane %v647, 1
        %v649 = vadd.f32 %v647, %v648
        %v650 = vadd.f32 %v543, %v544
        %v651 = vrot.slane %v650, 4
        %v652 = vadd.f32 %v650, %v651
        %v653 = vrot.slane %v652, 2
        %v654 = vadd.f32 %v652, %v653
        %v655 = vrot.slane %v654, 1
        %v656 = vadd.f32 %v654, %v655
        %vm673 = vcmask 1041409
        %v674 = vsel %vm673, %v558, %v551
        %vm675 = vcmask 1042434
        %v676 = vsel %vm675, %v565, %v674
        %vm677 = vcmask 1043459
        %v678 = vsel %vm677, %v572, %v676
        %vm679 = vcmask 1044484
        %v680 = vsel %vm679, %v579, %v678
        %vm681 = vcmask 1045509
        %v682 = vsel %vm681, %v586, %v680
        %vm683 = vcmask 1046534
        %v684 = vsel %vm683, %v593, %v682
        %vm685 = vcmask 1047559
        %v686 = vsel %vm685, %v600, %v684
        %v687 = vsel %vm673, %v614, %v607
        %v688 = vsel %vm675, %v621, %v687
        %v689 = vsel %vm677, %v628, %v688
        %v690 = vsel %vm679, %v635, %v689
        %v691 = vsel %vm681, %v642, %v690
        %v692 = vsel %vm683, %v649, %v691
        %v693 = vsel %vm685, %v656, %v692
        %v696 = vmul.f32 %v287, %v686
        %v697 = vmul.f32 %v288, %v693
        %v698 = vld [vmem:[#allocation5] sm:$0xff]
        %v699 = vld [vmem:[#allocation5 + $0x8] sm:$0xff]
        %v700 = vld [vmem:[#allocation5 + $0x10] sm:$0xff]
        %v701 = vld [vmem:[#allocation5 + $0x18] sm:$0xff]
        %v702 = vld [vmem:[#allocation5 + $0x20] sm:$0xff]
        %v703 = vld [vmem:[#allocation5 + $0x28] sm:$0xff]
        %v704 = vld [vmem:[#allocation5 + $0x30] sm:$0xff]
        %v705 = vld [vmem:[#allocation5 + $0x38] sm:$0xff]
        %v706 = vld [vmem:[#allocation5 + $0x40] sm:$0xff]
        %v707 = vld [vmem:[#allocation5 + $0x48] sm:$0xff]
        %v708 = vld [vmem:[#allocation5 + $0x50] sm:$0xff]
        %v709 = vld [vmem:[#allocation5 + $0x58] sm:$0xff]
        %v710 = vld [vmem:[#allocation5 + $0x60] sm:$0xff]
        %v711 = vld [vmem:[#allocation5 + $0x68] sm:$0xff]
        %v712 = vld [vmem:[#allocation5 + $0x70] sm:$0xff]
        %v713 = vld [vmem:[#allocation5 + $0x78] sm:$0xff]
        %v714 = vld [vmem:[#allocation5 + $0x80] sm:$0xff]
        %v715 = vld [vmem:[#allocation5 + $0x88] sm:$0xff]
        %v716 = vld [vmem:[#allocation5 + $0x90] sm:$0xff]
        %v717 = vld [vmem:[#allocation5 + $0x98] sm:$0xff]
        %v718 = vld [vmem:[#allocation5 + $0xa0] sm:$0xff]
        %v719 = vld [vmem:[#allocation5 + $0xa8] sm:$0xff]
        %v720 = vld [vmem:[#allocation5 + $0xb0] sm:$0xff]
        %v721 = vld [vmem:[#allocation5 + $0xb8] sm:$0xff]
        %v722 = vld [vmem:[#allocation5 + $0xc0] sm:$0xff]
        %v723 = vld [vmem:[#allocation5 + $0xc8] sm:$0xff]
        %v724 = vld [vmem:[#allocation5 + $0xd0] sm:$0xff]
        %v725 = vld [vmem:[#allocation5 + $0xd8] sm:$0xff]
        %v726 = vld [vmem:[#allocation5 + $0xe0] sm:$0xff]
        %v727 = vld [vmem:[#allocation5 + $0xe8] sm:$0xff]
        %v728 = vld [vmem:[#allocation5 + $0xf0] sm:$0xff]
        %v729 = vld [vmem:[#allocation5 + $0xf8] sm:$0xff]
        %v730 = vld [vmem:[#allocation5 + $0x100] sm:$0xff]
        %v731 = vld [vmem:[#allocation5 + $0x108] sm:$0xff]
        %v732 = vld [vmem:[#allocation5 + $0x110] sm:$0xff]
        %v733 = vld [vmem:[#allocation5 + $0x118] sm:$0xff]
        %v734 = vld [vmem:[#allocation5 + $0x120] sm:$0xff]
        %v735 = vld [vmem:[#allocation5 + $0x128] sm:$0xff]
        %v736 = vld [vmem:[#allocation5 + $0x130] sm:$0xff]
        %v737 = vld [vmem:[#allocation5 + $0x138] sm:$0xff]
        %v738 = vld [vmem:[#allocation5 + $0x140] sm:$0xff]
        %v739 = vld [vmem:[#allocation5 + $0x148] sm:$0xff]
        %v740 = vld [vmem:[#allocation5 + $0x150] sm:$0xff]
        %v741 = vld [vmem:[#allocation5 + $0x158] sm:$0xff]
        %v742 = vld [vmem:[#allocation5 + $0x160] sm:$0xff]
        %v743 = vld [vmem:[#allocation5 + $0x168] sm:$0xff]
        %v744 = vld [vmem:[#allocation5 + $0x170] sm:$0xff]
        %v745 = vld [vmem:[#allocation5 + $0x178] sm:$0xff]
        %v746 = vld [vmem:[#allocation5 + $0x180] sm:$0xff]
        %v747 = vld [vmem:[#allocation5 + $0x188] sm:$0xff]
        %v748 = vld [vmem:[#allocation5 + $0x190] sm:$0xff]
        %v749 = vld [vmem:[#allocation5 + $0x198] sm:$0xff]
        %v750 = vld [vmem:[#allocation5 + $0x1a0] sm:$0xff]
        %v751 = vld [vmem:[#allocation5 + $0x1a8] sm:$0xff]
        %v752 = vld [vmem:[#allocation5 + $0x1b0] sm:$0xff]
        %v753 = vld [vmem:[#allocation5 + $0x1b8] sm:$0xff]
        %v754 = vld [vmem:[#allocation5 + $0x1c0] sm:$0xff]
        %v755 = vld [vmem:[#allocation5 + $0x1c8] sm:$0xff]
        %v756 = vld [vmem:[#allocation5 + $0x1d0] sm:$0xff]
        %v757 = vld [vmem:[#allocation5 + $0x1d8] sm:$0xff]
        %v758 = vld [vmem:[#allocation5 + $0x1e0] sm:$0xff]
        %v759 = vld [vmem:[#allocation5 + $0x1e8] sm:$0xff]
        %v760 = vld [vmem:[#allocation5 + $0x1f0] sm:$0xff]
        %v761 = vld [vmem:[#allocation5 + $0x1f8] sm:$0xff]
        %v762 = vld [vmem:[#allocation5 + $0x200] sm:$0xff]
        %v763 = vld [vmem:[#allocation5 + $0x208] sm:$0xff]
        %v764 = vld [vmem:[#allocation5 + $0x210] sm:$0xff]
        %v765 = vld [vmem:[#allocation5 + $0x218] sm:$0xff]
        %v766 = vld [vmem:[#allocation5 + $0x220] sm:$0xff]
        %v767 = vld [vmem:[#allocation5 + $0x228] sm:$0xff]
        %v768 = vld [vmem:[#allocation5 + $0x230] sm:$0xff]
        %v769 = vld [vmem:[#allocation5 + $0x238] sm:$0xff]
        %v770 = vld [vmem:[#allocation5 + $0x240] sm:$0xff]
        %v771 = vld [vmem:[#allocation5 + $0x248] sm:$0xff]
        %v772 = vld [vmem:[#allocation5 + $0x250] sm:$0xff]
        %v773 = vld [vmem:[#allocation5 + $0x258] sm:$0xff]
        %v774 = vld [vmem:[#allocation5 + $0x260] sm:$0xff]
        %v775 = vld [vmem:[#allocation5 + $0x268] sm:$0xff]
        %v776 = vld [vmem:[#allocation5 + $0x270] sm:$0xff]
        %v777 = vld [vmem:[#allocation5 + $0x278] sm:$0xff]
        %v778 = vld [vmem:[#allocation5 + $0x280] sm:$0xff]
        %v779 = vld [vmem:[#allocation5 + $0x288] sm:$0xff]
        %v780 = vld [vmem:[#allocation5 + $0x290] sm:$0xff]
        %v781 = vld [vmem:[#allocation5 + $0x298] sm:$0xff]
        %v782 = vld [vmem:[#allocation5 + $0x2a0] sm:$0xff]
        %v783 = vld [vmem:[#allocation5 + $0x2a8] sm:$0xff]
        %v784 = vld [vmem:[#allocation5 + $0x2b0] sm:$0xff]
        %v785 = vld [vmem:[#allocation5 + $0x2b8] sm:$0xff]
        %v786 = vld [vmem:[#allocation5 + $0x2c0] sm:$0xff]
        %v787 = vld [vmem:[#allocation5 + $0x2c8] sm:$0xff]
        %v788 = vld [vmem:[#allocation5 + $0x2d0] sm:$0xff]
        %v789 = vld [vmem:[#allocation5 + $0x2d8] sm:$0xff]
        %v790 = vld [vmem:[#allocation5 + $0x2e0] sm:$0xff]
        %v791 = vld [vmem:[#allocation5 + $0x2e8] sm:$0xff]
        %v792 = vld [vmem:[#allocation5 + $0x2f0] sm:$0xff]
        %v793 = vld [vmem:[#allocation5 + $0x2f8] sm:$0xff]
        %794 = vmatpush.msra.mxu0 %v728
        %795 = vmatpush.msra.mxu0 %v726
        %796 = vmatpush.msra.mxu0 %v724
        %797 = vmatpush.msra.mxu0 %v722
        %798 = vmatpush.msra.mxu0 %v720
        %799 = vmatpush.msra.mxu0 %v718
        %800 = vmatpush.msra.mxu0 %v716
        %801 = vmatpush.msra.mxu0 %v714
        %802 = vmatpush.msra.mxu0 %v712
        %803 = vmatpush.msra.mxu0 %v710
        %804 = vmatpush.msra.mxu0 %v708
        %805 = vmatpush.msra.mxu0 %v706
        %806 = vmatpush.msra.mxu0 %v704
        %807 = vmatpush.msra.mxu0 %v702
        %808 = vmatpush.msra.mxu0 %v700
        %809 = vmatpush.msra.mxu0 %v698
        %810 = vmatmul.f32.gmra.mxu0 %v287
        %v811 = vpop.f32.mrf.mxu0
        %v812 = vadd.f32 0.0, %v811
        %813 = vmatmul.f32.gmra.mxu0 %v288
        %v814 = vpop.f32.mrf.mxu0
        %v815 = vadd.f32 0.0, %v814
        %816 = vdwg.mxu0
        %817 = vmatpush.msra.mxu0 %v760
        %818 = vmatpush.msra.mxu0 %v758
        %819 = vmatpush.msra.mxu0 %v756
        %820 = vmatpush.msra.mxu0 %v754
        %821 = vmatpush.msra.mxu0 %v752
        %822 = vmatpush.msra.mxu0 %v750
        %823 = vmatpush.msra.mxu0 %v748
        %824 = vmatpush.msra.mxu0 %v746
        %825 = vmatpush.msra.mxu0 %v744
        %826 = vmatpush.msra.mxu0 %v742
        %827 = vmatpush.msra.mxu0 %v740
        %828 = vmatpush.msra.mxu0 %v738
        %829 = vmatpush.msra.mxu0 %v736
        %830 = vmatpush.msra.mxu0 %v734
        %831 = vmatpush.msra.mxu0 %v732
        %832 = vmatpush.msra.mxu0 %v730
        %833 = vmatmul.f32.gmra.mxu0 %v686
        %v834 = vpop.f32.mrf.mxu0
        %v835 = vadd.f32 %v812, %v834
        %836 = vmatmul.f32.gmra.mxu0 %v693
        %v837 = vpop.f32.mrf.mxu0
        %v838 = vadd.f32 %v815, %v837
        %839 = vdwg.mxu0
        %840 = vmatpush.msra.mxu0 %v792
        %841 = vmatpush.msra.mxu0 %v790
        %842 = vmatpush.msra.mxu0 %v788
        %843 = vmatpush.msra.mxu0 %v786
        %844 = vmatpush.msra.mxu0 %v784
        %845 = vmatpush.msra.mxu0 %v782
        %846 = vmatpush.msra.mxu0 %v780
        %847 = vmatpush.msra.mxu0 %v778
        %848 = vmatpush.msra.mxu0 %v776
        %849 = vmatpush.msra.mxu0 %v774
        %850 = vmatpush.msra.mxu0 %v772
        %851 = vmatpush.msra.mxu0 %v770
        %852 = vmatpush.msra.mxu0 %v768
        %853 = vmatpush.msra.mxu0 %v766
        %854 = vmatpush.msra.mxu0 %v764
        %855 = vmatpush.msra.mxu0 %v762
        %856 = vmatmul.f32.gmra.mxu0 %v696
        %v857 = vpop.f32.mrf.mxu0
        %v858 = vadd.f32 %v835, %v857
        %859 = vmatmul.f32.gmra.mxu0 %v697
        %v860 = vpop.f32.mrf.mxu0
        %v861 = vadd.f32 %v838, %v860
        %862 = vdwg.mxu0
        %863 = vmatpush.msra.mxu0 %v729
        %864 = vmatpush.msra.mxu0 %v727
        %865 = vmatpush.msra.mxu0 %v725
        %866 = vmatpush.msra.mxu0 %v723
        %867 = vmatpush.msra.mxu0 %v721
        %868 = vmatpush.msra.mxu0 %v719
        %869 = vmatpush.msra.mxu0 %v717
        %870 = vmatpush.msra.mxu0 %v715
        %871 = vmatpush.msra.mxu0 %v713
        %872 = vmatpush.msra.mxu0 %v711
        %873 = vmatpush.msra.mxu0 %v709
        %874 = vmatpush.msra.mxu0 %v707
        %875 = vmatpush.msra.mxu0 %v705
        %876 = vmatpush.msra.mxu0 %v703
        %877 = vmatpush.msra.mxu0 %v701
        %878 = vmatpush.msra.mxu0 %v699
        %879 = vmatmul.f32.gmra.mxu0 %v287
        %v880 = vpop.f32.mrf.mxu0
        %v881 = vadd.f32 0.0, %v880
        %882 = vmatmul.f32.gmra.mxu0 %v288
        %v883 = vpop.f32.mrf.mxu0
        %v884 = vadd.f32 0.0, %v883
        %885 = vdwg.mxu0
        %886 = vmatpush.msra.mxu0 %v761
        %887 = vmatpush.msra.mxu0 %v759
        %888 = vmatpush.msra.mxu0 %v757
        %889 = vmatpush.msra.mxu0 %v755
        %890 = vmatpush.msra.mxu0 %v753
        %891 = vmatpush.msra.mxu0 %v751
        %892 = vmatpush.msra.mxu0 %v749
        %893 = vmatpush.msra.mxu0 %v747
        %894 = vmatpush.msra.mxu0 %v745
        %895 = vmatpush.msra.mxu0 %v743
        %896 = vmatpush.msra.mxu0 %v741
        %897 = vmatpush.msra.mxu0 %v739
        %898 = vmatpush.msra.mxu0 %v737
        %899 = vmatpush.msra.mxu0 %v735
        %900 = vmatpush.msra.mxu0 %v733
        %901 = vmatpush.msra.mxu0 %v731
        %902 = vmatmul.f32.gmra.mxu0 %v686
        %v903 = vpop.f32.mrf.mxu0
        %v904 = vadd.f32 %v881, %v903
        %905 = vmatmul.f32.gmra.mxu0 %v693
        %v906 = vpop.f32.mrf.mxu0
        %v907 = vadd.f32 %v884, %v906
        %908 = vdwg.mxu0
        %909 = vmatpush.msra.mxu0 %v793
        %910 = vmatpush.msra.mxu0 %v791
        %911 = vmatpush.msra.mxu0 %v789
        %912 = vmatpush.msra.mxu0 %v787
        %913 = vmatpush.msra.mxu0 %v785
        %914 = vmatpush.msra.mxu0 %v783
        %915 = vmatpush.msra.mxu0 %v781
        %916 = vmatpush.msra.mxu0 %v779
        %917 = vmatpush.msra.mxu0 %v777
        %918 = vmatpush.msra.mxu0 %v775
        %919 = vmatpush.msra.mxu0 %v773
        %920 = vmatpush.msra.mxu0 %v771
        %921 = vmatpush.msra.mxu0 %v769
        %922 = vmatpush.msra.mxu0 %v767
        %923 = vmatpush.msra.mxu0 %v765
        %924 = vmatpush.msra.mxu0 %v763
        %925 = vmatmul.f32.gmra.mxu0 %v696
        %v926 = vpop.f32.mrf.mxu0
        %v927 = vadd.f32 %v904, %v926
        %928 = vmatmul.f32.gmra.mxu0 %v697
        %v929 = vpop.f32.mrf.mxu0
        %v930 = vadd.f32 %v907, %v929
        %931 = vdwg.mxu0
        %v932 = vtanh.pop %v858
        %v933 = vtanh.pop %v861
        %v934 = vxor.u32 %v927, 2147483648
        %v935 = vxor.u32 %v930, 2147483648
        %v936 = vmul.f32 %v934, 1.442695
        %v937 = vpow.pop %v936
        %v938 = vmul.f32 %v935, 1.442695
        %v939 = vpow.pop %v938
        %v940 = vadd.f32 %v937, 1.0
        %v941 = vadd.f32 %v939, 1.0
        %v942 = vrcp.pop %v940
        %v943 = vmul.f32 %v940, %v942
        %v944 = vsub.f32 1.0, %v943
        %v945 = vmul.f32 %v942, %v944
        %v946 = vadd.f32 %v942, %v945
        %vm947 = vweird.f32 %v940
        %vm948 = vweird.f32 %v942
        %vm949 = vmor %vm947, %vm948
        %v950 = vsel %vm949, %v942, %v946
        %v951 = vand.u32 2147483647, %v940
        %vm952 = vcmp.eq.f32.partialorder %v951, 8.507059e+37
        %v953 = vand.u32 %v940, 2147483648
        %v954 = vor.u32 1.1754944e-38, %v953
        %v955 = vsel %vm952, %v954, %v950
        %v956 = vmul.f32 1.0, %v955
        %v957 = vrcp.pop %v941
        %v958 = vmul.f32 %v941, %v957
        %v959 = vsub.f32 1.0, %v958
        %v960 = vmul.f32 %v957, %v959
        %v961 = vadd.f32 %v957, %v960
        %vm962 = vweird.f32 %v941
        %vm963 = vweird.f32 %v957
        %vm964 = vmor %vm962, %vm963
        %v965 = vsel %vm964, %v957, %v961
        %v966 = vand.u32 2147483647, %v941
        %vm967 = vcmp.eq.f32.partialorder %v966, 8.507059e+37
        %v968 = vand.u32 %v941, 2147483648
        %v969 = vor.u32 1.1754944e-38, %v968
        %v970 = vsel %vm967, %v969, %v965
        %v971 = vmul.f32 1.0, %v970
        %v972 = vmul.f32 %v956, %v932
        %v973 = vmul.f32 %v971, %v933
        %v974 = vsub.f32 1.0, %v956
        %v975 = vsub.f32 1.0, %v971
        %v976 = vmul.f32 %v974, %v287
        %v977 = vmul.f32 %v975, %v288
        %v978 = vadd.f32 %v972, %v976
        %v979 = vadd.f32 %v973, %v977
        %980 = vst [vmem:[%s270] sm:$0xff] %v978
        %981 = vst [vmem:[%s270 + $0x8] sm:$0xff] %v979
        %s982 = sand.u32 %s129, 1
        %s983 = scalar_lea.sflag [#allocation4], %s982
        %s984 = sand.u32 %s129, 1
        %s985 = smul.addr %s984, 16
        %s986 = scalar_lea.vmem [#allocation7], %s985
        // Predicated region
        $region45: #{tpu_custom_call.1} parent=35 // pred_check
          %p987 = pneg %p139
        $region46: #{tpu_custom_call.1} parent=35 // pred_check_branch
          %989 = sbr.rel (%p987) target = $region48
        $region47: #{tpu_custom_call.1} parent=35 // pred_region
          %s990 = smul.u32 2, %s22
          %992 = vsyncadd %s983, 0
          %s993 = smul.addr %s990, 8
          %s994 = scalar_lea.hbm %s4, %s993
          %s995 = sshll.u32 %s986, 4
          %s996 = int_to_ptr.vmem [resolvable:$true] %s995
          %s997 = sshll.u32 %s994, 4
          %s998 = int_to_ptr.hbm [resolvable:$true] %s997
          %1003 = dma.vmem_to_hbm [thread:$0]  %s996, 256, %s998, %s983, 128, 128, 8
        $region48: #{tpu_custom_call.1} parent=35 // pred_fallthru
          _
      $region36: #{tpu_custom_call.1} parent=5 // pred_fallthru
        _
      %p1004 = scmp.le.s32.totalorder 2, %s17
      // Predicated region
      $region49: #{tpu_custom_call.1} parent=5 // pred_check
        %p1005 = pneg %p1004
      $region50: #{tpu_custom_call.1} parent=5 // pred_check_branch
        %1007 = sbr.rel (%p1005) target = $region52
      $region51: #{tpu_custom_call.1} parent=5 // pred_region
        %s1008 = ssub.s32 %s17, 2
        // Predicated region
        $region53: #{tpu_custom_call.1} parent=51 // pred_check
          %p1009 = pneg %p145
        $region54: #{tpu_custom_call.1} parent=51 // pred_check_branch
          %1011 = sbr.rel (%p1009) target = $region56
        $region55: #{tpu_custom_call.1} parent=51 // pred_region
          %s1012 = sand.u32 %s130, 1
          %s1013 = scalar_lea.sflag [#allocation4], %s1012
          %s1014 = sand.u32 %s130, 1
          %s1015 = smul.addr %s1014, 16
          %s1016 = scalar_lea.vmem [#allocation7], %s1015
          %1018 = dma.done %s1013, 256
        $region56: #{tpu_custom_call.1} parent=51 // pred_fallthru
          _
      $region52: #{tpu_custom_call.1} parent=5 // pred_fallthru
        _
    $region6: #{tpu_custom_call.1} parent=1 // loop_footer
      %s21 = sadd.s32 1, %s17
    $region7: #{tpu_custom_call.1} parent=1 // loop_footer_branch
      %16 = sbr.rel target = $region3
    $region8: #{tpu_custom_call.1} parent=1 // loop_exit
      _
    %1019 = vsyncpa [#allocation3], 1
    %s1020 = scalar_lea.sflag [#allocation3], 1
    %1021 = vsyncpa %s1020, 1
    %1022 = vsyncpa [#allocation6], 1
    %1023 = vsyncpa [#allocation4], 1
    %s1024 = scalar_lea.sflag [#allocation4], 1
    %1025 = vsyncpa %s1024, 1

// kernel: tpu_custom_call.1
$region0: #{tpu_custom_call.1}
  #allocation0 [shape = 'u32[]', space=smem, size = 0x4, offset = 0x4, fixed_abs, tag = 'smem constant byte address 0x4 - core index']
  #allocation1 [shape = 'u32[72,128]{1,0:T(1,128)}', space=vmem, size = 0x9000, scoped, tag = 'internal scratch']
  %s0 = inlined_call_operand.hbm [shape: f32[64,128], index: 0, kind: input, shape index: {}]
  %s1 = inlined_call_operand.vmem [shape: f32[64,16,128], index: 1, kind: input, shape index: {}]
  %s2 = inlined_call_operand.vmem [shape: f32[64,16,1], index: 2, kind: input, shape index: {}]
  %s3 = inlined_call_operand.hbm [shape: f32[384,256], index: 3, kind: input, shape index: {}]
  %s4 = inlined_call_operand.hbm [shape: f32[64,128], index: 4, kind: output, shape index: {}]
  %s5 = sld [smem:[#allocation0]]
  $region57: #{tpu_custom_call.1} parent=0
    _
  %s7 = ssub.s32 1, %s5
  %s8 = scalar_select 0, %s7, %s5
  $region1: #{tpu_custom_call.1} parent=0
    #allocation2 [shape = 'u8[16384]{0}', space=vmem, size = 0x4000, scoped, tag = 'input window, operand 0']
    #allocation3 [shape = 's32[2]{0}', space=sflag, size = 0x8, scoped, tag = 'scoped memory for tpu_custom_call.1']
    #allocation4 [shape = 's32[2]{0}', space=sflag, size = 0x8, scoped, tag = 'scoped memory for tpu_custom_call.1']
    #allocation5 [shape = 'u8[393216]{0}', space=vmem, size = 0x60000, scoped, tag = 'input window, operand 3, single buffered']
    #allocation6 [shape = 's32[1]{0}', space=sflag, size = 0x4, scoped, tag = 'scoped memory for tpu_custom_call.1']
    #allocation7 [shape = 'u8[16384]{0}', space=vmem, size = 0x4000, scoped, tag = 'output window, operand 0']
    %9 = vsyncpa [#allocation3], 0
    %s10 = scalar_lea.sflag [#allocation3], 1
    %11 = vsyncpa %s10, 0
    %12 = vsyncpa [#allocation6], 0
    %13 = vsyncpa [#allocation4], 0
    %s14 = scalar_lea.sflag [#allocation4], 1
    %15 = vsyncpa %s14, 0
    loop: start=0, step=1, limit=6
    $region2: #{tpu_custom_call.1} parent=1 // loop_pre_header
      _
    $region3: #{tpu_custom_call.1} parent=1 // loop_header
      %s17 = sphi 0, %s21
      %p18 = scmp.ge.s32.totalorder %s17, 6
      %s27 = sphi 0, %s29
      %s30 = sphi 0, %s27
      %s31 = sphi 0, %s30
      %s47 = sphi 0, %s31
      %s53 = sphi 0, %s55
      %s56 = sphi 0, %s53
      %s57 = sphi 0, %s56
      %s73 = sphi 0, %s57
      %s79 = sphi 0, %s81
      %s82 = sphi 0, %s79
      %s83 = sphi 0, %s82
      %s99 = sphi 0, %s83
      %s103 = sphi 0, %s103
      %s105 = sphi 0, %s103
      %s106 = sphi 0, %s105
      %s120 = sphi 0, %s106
      %s126 = sphi 0, %s128
      %s129 = sphi 0, %s126
      %s130 = sphi 0, %s129
      %s146 = sphi 0, %s130
    $region4: #{tpu_custom_call.1} parent=1 // loop_header_branch
      %20 = sbr.rel (%p18) target = $region8
    $region5: #{tpu_custom_call.1} parent=1 // loop_body
      %s22 = ssub.s32 %s17, 1
      %s23 = ssub.s32 %s17, 2
      %s24 = sadd.s32 %s17, 1
      %s25 = ssub.s32 %s17, %s24
      %p26 = scmp.eq.s32.totalorder %s25, 0
      %s28 = sadd.s32 %s27, 1
      %s29 = scalar_select %p26, %s27, %s28
      %p32 = pneg %p26
      %p33 = scmp.eq.s32.totalorder %s17, 3
      %p34 = por %p32, %p33
      %p35 = scmp.ne.s32.totalorder %s27, %s30
      %p36 = scmp.eq.s32.totalorder %s17, 0
      %p37 = por %p35, %p36
      %p38 = scmp.ne.s32.totalorder %s27, %s30
      %p39 = scmp.eq.s32.totalorder %s22, 3
      %p40 = por %p38, %p39
      %p41 = scmp.ne.s32.totalorder %s30, %s31
      %p42 = scmp.eq.s32.totalorder %s22, 0
      %p43 = por %p41, %p42
      %p44 = scmp.ne.s32.totalorder %s30, %s31
      %p45 = scmp.eq.s32.totalorder %s23, 3
      %p46 = por %p44, %p45
      %p48 = scmp.ne.s32.totalorder %s31, %s47
      %p49 = scmp.eq.s32.totalorder %s23, 0
      %p50 = por %p48, %p49
      %s51 = ssub.s32 %s17, %s24
      %p52 = scmp.eq.s32.totalorder %s51, 0
      %s54 = sadd.s32 %s53, 1
      %s55 = scalar_select %p52, %s53, %s54
      %p58 = pneg %p52
      %p59 = scmp.eq.s32.totalorder %s17, 3
      %p60 = por %p58, %p59
      %p61 = scmp.ne.s32.totalorder %s53, %s56
      %p62 = scmp.eq.s32.totalorder %s17, 0
      %p63 = por %p61, %p62
      %p64 = scmp.ne.s32.totalorder %s53, %s56
      %p65 = scmp.eq.s32.totalorder %s22, 3
      %p66 = por %p64, %p65
      %p67 = scmp.ne.s32.totalorder %s56, %s57
      %p68 = scmp.eq.s32.totalorder %s22, 0
      %p69 = por %p67, %p68
      %p70 = scmp.ne.s32.totalorder %s56, %s57
      %p71 = scmp.eq.s32.totalorder %s23, 3
      %p72 = por %p70, %p71
      %p74 = scmp.ne.s32.totalorder %s57, %s73
      %p75 = scmp.eq.s32.totalorder %s23, 0
      %p76 = por %p74, %p75
      %s77 = ssub.s32 %s17, %s24
      %p78 = scmp.eq.s32.totalorder %s77, 0
      %s80 = sadd.s32 %s79, 1
      %s81 = scalar_select %p78, %s79, %s80
      %p84 = pneg %p78
      %p85 = scmp.eq.s32.totalorder %s17, 3
      %p86 = por %p84, %p85
      %p87 = scmp.ne.s32.totalorder %s79, %s82
      %p88 = scmp.eq.s32.totalorder %s17, 0
      %p89 = por %p87, %p88
      %p90 = scmp.ne.s32.totalorder %s79, %s82
      %p91 = scmp.eq.s32.totalorder %s22, 3
      %p92 = por %p90, %p91
      %p93 = scmp.ne.s32.totalorder %s82, %s83
      %p94 = scmp.eq.s32.totalorder %s22, 0
      %p95 = por %p93, %p94
      %p96 = scmp.ne.s32.totalorder %s82, %s83
      %p97 = scmp.eq.s32.totalorder %s23, 3
      %p98 = por %p96, %p97
      %p100 = scmp.ne.s32.totalorder %s83, %s99
      %p101 = scmp.eq.s32.totalorder %s23, 0
      %p102 = por %p100, %p101
      %s104 = sadd.s32 %s103, 1
      %p107 = scmp.eq.s32.totalorder %s17, 3
      %p108 = scmp.ne.s32.totalorder %s103, %s105
      %p109 = scmp.eq.s32.totalorder %s17, 0
      %p110 = por %p108, %p109
      %p111 = scmp.ne.s32.totalorder %s103, %s105
      %p112 = scmp.eq.s32.totalorder %s22, 3
      %p113 = por %p111, %p112
      %p114 = scmp.ne.s32.totalorder %s105, %s106
      %p115 = scmp.eq.s32.totalorder %s22, 0
      %p116 = por %p114, %p115
      %p117 = scmp.ne.s32.totalorder %s105, %s106
      %p118 = scmp.eq.s32.totalorder %s23, 3
      %p119 = por %p117, %p118
      %p121 = scmp.ne.s32.totalorder %s106, %s120
      %p122 = scmp.eq.s32.totalorder %s23, 0
      %p123 = por %p121, %p122
      %s124 = ssub.s32 %s17, %s24
      %p125 = scmp.eq.s32.totalorder %s124, 0
      %s127 = sadd.s32 %s126, 1
      %s128 = scalar_select %p125, %s126, %s127
      %p131 = pneg %p125
      %p132 = scmp.eq.s32.totalorder %s17, 3
      %p133 = por %p131, %p132
      %p134 = scmp.ne.s32.totalorder %s126, %s129
      %p135 = scmp.eq.s32.totalorder %s17, 0
      %p136 = por %p134, %p135
      %p137 = scmp.ne.s32.totalorder %s126, %s129
      %p138 = scmp.eq.s32.totalorder %s22, 3
      %p139 = por %p137, %p138
      %p140 = scmp.ne.s32.totalorder %s129, %s130
      %p141 = scmp.eq.s32.totalorder %s22, 0
      %p142 = por %p140, %p141
      %p143 = scmp.ne.s32.totalorder %s129, %s130
      %p144 = scmp.eq.s32.totalorder %s23, 3
      %p145 = por %p143, %p144
      %p147 = scmp.ne.s32.totalorder %s130, %s146
      %p148 = scmp.eq.s32.totalorder %s23, 0
      %p149 = por %p147, %p148
      %p150 = scmp.le.s32.totalorder 1, %s17
      %p151 = scmp.lt.s32.totalorder %s17, 5
      %p152 = pnand %p150, %p151
      %p153 = pneg %p152
      // Predicated region
      $region9: #{tpu_custom_call.1} parent=5 // pred_check
        _
      $region10: #{tpu_custom_call.1} parent=5 // pred_check_branch
        %155 = sbr.rel (%p152) target = $region12
      $region11: #{tpu_custom_call.1} parent=5 // pred_region
        %s156 = ssub.s32 %s17, 1
        // Predicated region
        $region13: #{tpu_custom_call.1} parent=11 // pred_check
          %p157 = pneg %p116
        $region14: #{tpu_custom_call.1} parent=11 // pred_check_branch
          %159 = sbr.rel (%p157) target = $region16
        $region15: #{tpu_custom_call.1} parent=11 // pred_region
          %161 = vsyncadd [#allocation6], 0
          %s162 = sshll.u32 %s3, 4
          %s163 = int_to_ptr.hbm [resolvable:$true] %s162
          %s164 = sshll.u32 [#allocation5], 4
          %s165 = int_to_ptr.vmem [resolvable:$true] %s164
          %170 = dma.hbm_to_vmem [thread:$0]  %s163, 12288, %s165, [#allocation6], 256, 256, 16
        $region16: #{tpu_custom_call.1} parent=11 // pred_fallthru
          _
      $region12: #{tpu_custom_call.1} parent=5 // pred_fallthru
        _
      %p171 = scmp.lt.s32.totalorder %s17, 4
      // Predicated region
      $region17: #{tpu_custom_call.1} parent=5 // pred_check
        %p172 = pneg %p171
      $region18: #{tpu_custom_call.1} parent=5 // pred_check_branch
        %174 = sbr.rel (%p172) target = $region20
      $region19: #{tpu_custom_call.1} parent=5 // pred_region
        // Predicated region
        $region21: #{tpu_custom_call.1} parent=19 // pred_check
          %p175 = pneg %p37
        $region22: #{tpu_custom_call.1} parent=19 // pred_check_branch
          %177 = sbr.rel (%p175) target = $region24
        $region23: #{tpu_custom_call.1} parent=19 // pred_region
          %s178 = sand.u32 %s27, 1
          %s179 = scalar_lea.sflag [#allocation3], %s178
          %s180 = sand.u32 %s27, 1
          %s181 = smul.addr %s180, 16
          %s182 = scalar_lea.vmem [#allocation2], %s181
          %s183 = smul.u32 2, %s17
          %185 = vsyncadd %s179, 0
          %s186 = smul.addr %s183, 8
          %s187 = scalar_lea.hbm %s0, %s186
          %s188 = sshll.u32 %s187, 4
          %s189 = int_to_ptr.hbm [resolvable:$true] %s188
          %s190 = sshll.u32 %s182, 4
          %s191 = int_to_ptr.vmem [resolvable:$true] %s190
          %196 = dma.hbm_to_vmem [thread:$0]  %s189, 256, %s191, %s179, 128, 128, 8
        $region24: #{tpu_custom_call.1} parent=19 // pred_fallthru
          _
        // Predicated region
        $region25: #{tpu_custom_call.1} parent=19 // pred_check
          %p197 = pneg %p63
        $region26: #{tpu_custom_call.1} parent=19 // pred_check_branch
          %199 = sbr.rel (%p197) target = $region28
        $region27: #{tpu_custom_call.1} parent=19 // pred_region
          %s200 = smul.u32 16, %s17
          %p201 = scmp.lt.s32.totalorder %s200, 63
          %s202 = scalar_select %p201, %s200, 63
          %s203 = smul.addr %s202, 2
          %s204 = smul.addr %s203, 8
          %s205 = scalar_lea.vmem %s1, %s204
          %s206 = smul.u32 16, %s17
        $region28: #{tpu_custom_call.1} parent=19 // pred_fallthru
          _
        // Predicated region
        $region29: #{tpu_custom_call.1} parent=19 // pred_check
          %p207 = pneg %p89
        $region30: #{tpu_custom_call.1} parent=19 // pred_check_branch
          %209 = sbr.rel (%p207) target = $region32
        $region31: #{tpu_custom_call.1} parent=19 // pred_region
          %s210 = smul.u32 16, %s17
          %p211 = scmp.lt.s32.totalorder %s210, 63
          %s212 = scalar_select %p211, %s210, 63
          %s213 = smul.addr %s212, 2
          %s214 = smul.addr %s213, 8
          %s215 = scalar_lea.vmem %s2, %s214
          %s216 = smul.u32 16, %s17
        $region32: #{tpu_custom_call.1} parent=19 // pred_fallthru
          _
      $region20: #{tpu_custom_call.1} parent=5 // pred_fallthru
        _
      %p217 = scmp.le.s32.totalorder 1, %s17
      %p218 = scmp.lt.s32.totalorder %s17, 5
      %p219 = pnand %p217, %p218
      %p220 = pneg %p219
      // Predicated region
      $region33: #{tpu_custom_call.1} parent=5 // pred_check
        _
      $region34: #{tpu_custom_call.1} parent=5 // pred_check_branch
        %222 = sbr.rel (%p219) target = $region36
      $region35: #{tpu_custom_call.1} parent=5 // pred_region
        %s223 = ssub.s32 %s17, 1
        %s224 = sand.u32 %s30, 1
        %s225 = scalar_lea.sflag [#allocation3], %s224
        %s226 = sand.u32 %s30, 1
        %s227 = smul.addr %s226, 16
        %s228 = scalar_lea.vmem [#allocation2], %s227
        // Predicated region
        $region37: #{tpu_custom_call.1} parent=35 // pred_check
          %p229 = pneg %p43
        $region38: #{tpu_custom_call.1} parent=35 // pred_check_branch
          %231 = sbr.rel (%p229) target = $region40
        $region39: #{tpu_custom_call.1} parent=35 // pred_region
          %233 = dma.done %s225, 256
        $region40: #{tpu_custom_call.1} parent=35 // pred_fallthru
          _
        // Predicated region
        $region41: #{tpu_custom_call.1} parent=35 // pred_check
          %p234 = pneg %p116
        $region42: #{tpu_custom_call.1} parent=35 // pred_check_branch
          %236 = sbr.rel (%p234) target = $region44
        $region43: #{tpu_custom_call.1} parent=35 // pred_region
          %238 = dma.done [#allocation6], 12288
        $region44: #{tpu_custom_call.1} parent=35 // pred_fallthru
          _
        %s239 = sand.u32 %s30, 1
        %s240 = scalar_lea.sflag [#allocation3], %s239
        %s241 = sand.u32 %s30, 1
        %s242 = smul.addr %s241, 16
        %s243 = scalar_lea.vmem [#allocation2], %s242
        %p244 = pneg %p43
        %p245 = pneg %p40
        %s246 = smul.u32 16, %s22
        %p247 = scmp.lt.s32.totalorder %s246, 63
        %s248 = scalar_select %p247, %s246, 63
        %s249 = smul.addr %s248, 2
        %s250 = smul.addr %s249, 8
        %s251 = scalar_lea.vmem %s1, %s250
        %p252 = pneg %p69
        %p253 = pneg %p66
        %s254 = smul.u32 16, %s22
        %p255 = scmp.lt.s32.totalorder %s254, 63
        %s256 = scalar_select %p255, %s254, 63
        %s257 = smul.addr %s256, 2
        %s258 = smul.addr %s257, 8
        %s259 = scalar_lea.vmem %s2, %s258
        %p260 = pneg %p95
        %p261 = pneg %p92
        %p262 = pneg %p116
        %p263 = pneg %p113
        %p264 = pneg %p142
        %p265 = pneg %p139
        %s266 = sand.u32 %s129, 1
        %s267 = scalar_lea.sflag [#allocation4], %s266
        %s268 = sand.u32 %s129, 1
        %s269 = smul.addr %s268, 16
        %s270 = scalar_lea.vmem [#allocation7], %s269
        %s271 = smul.u32 2, %s22
        %s272 = smul.u32 16, %s22
        %p273 = scmp.lt.s32.totalorder %s272, 63
        %s274 = scalar_select %p273, %s272, 63
        %s275 = smul.addr %s274, 2
        %s276 = smul.addr %s275, 8
        %s277 = scalar_lea.vmem %s1, %s276
        %s278 = smul.u32 16, %s22
        %s279 = smul.u32 16, %s22
        %p280 = scmp.lt.s32.totalorder %s279, 63
        %s281 = scalar_select %p280, %s279, 63
        %s282 = smul.addr %s281, 2
        %s283 = smul.addr %s282, 8
        %s284 = scalar_lea.vmem %s2, %s283
        %s285 = smul.u32 16, %s22
        %s286 = smul.u32 2, %s22
        %v287 = vld [vmem:[%s228] sm:$0xff]
        %v288 = vld [vmem:[%s228 + $0x8] sm:$0xff]
        %v289 = vld [vmem:[%s284] sm:$0xff]
        %v290 = vld [vmem:[%s284 + $0x8] sm:$0xff]
        %v291 = vld [vmem:[%s284 + $0x10] sm:$0xff]
        %v292 = vld [vmem:[%s284 + $0x18] sm:$0xff]
        %v293 = vld [vmem:[%s284 + $0x20] sm:$0xff]
        %v294 = vld [vmem:[%s284 + $0x28] sm:$0xff]
        %v295 = vld [vmem:[%s284 + $0x30] sm:$0xff]
        %v296 = vld [vmem:[%s284 + $0x38] sm:$0xff]
        %v297 = vld [vmem:[%s284 + $0x40] sm:$0xff]
        %v298 = vld [vmem:[%s284 + $0x48] sm:$0xff]
        %v299 = vld [vmem:[%s284 + $0x50] sm:$0xff]
        %v300 = vld [vmem:[%s284 + $0x58] sm:$0xff]
        %v301 = vld [vmem:[%s284 + $0x60] sm:$0xff]
        %v302 = vld [vmem:[%s284 + $0x68] sm:$0xff]
        %v303 = vld [vmem:[%s284 + $0x70] sm:$0xff]
        %v304 = vld [vmem:[%s284 + $0x78] sm:$0xff]
        %v305 = vld [vmem:[%s284 + $0x80] sm:$0xff]
        %v306 = vld [vmem:[%s284 + $0x88] sm:$0xff]
        %v307 = vld [vmem:[%s284 + $0x90] sm:$0xff]
        %v308 = vld [vmem:[%s284 + $0x98] sm:$0xff]
        %v309 = vld [vmem:[%s284 + $0xa0] sm:$0xff]
        %v310 = vld [vmem:[%s284 + $0xa8] sm:$0xff]
        %v311 = vld [vmem:[%s284 + $0xb0] sm:$0xff]
        %v312 = vld [vmem:[%s284 + $0xb8] sm:$0xff]
        %v313 = vld [vmem:[%s284 + $0xc0] sm:$0xff]
        %v314 = vld [vmem:[%s284 + $0xc8] sm:$0xff]
        %v315 = vld [vmem:[%s284 + $0xd0] sm:$0xff]
        %v316 = vld [vmem:[%s284 + $0xd8] sm:$0xff]
        %v317 = vld [vmem:[%s284 + $0xe0] sm:$0xff]
        %v318 = vld [vmem:[%s284 + $0xe8] sm:$0xff]
        %v319 = vld [vmem:[%s284 + $0xf0] sm:$0xff]
        %v320 = vld [vmem:[%s284 + $0xf8] sm:$0xff]
        %v321 = vld [vmem:[%s277] sm:$0xff]
        %v322 = vld [vmem:[%s277 + $0x8] sm:$0xff]
        %v323 = vld [vmem:[%s277 + $0x10] sm:$0xff]
        %v324 = vld [vmem:[%s277 + $0x18] sm:$0xff]
        %v325 = vld [vmem:[%s277 + $0x20] sm:$0xff]
        %v326 = vld [vmem:[%s277 + $0x28] sm:$0xff]
        %v327 = vld [vmem:[%s277 + $0x30] sm:$0xff]
        %v328 = vld [vmem:[%s277 + $0x38] sm:$0xff]
        %v329 = vld [vmem:[%s277 + $0x40] sm:$0xff]
        %v330 = vld [vmem:[%s277 + $0x48] sm:$0xff]
        %v331 = vld [vmem:[%s277 + $0x50] sm:$0xff]
        %v332 = vld [vmem:[%s277 + $0x58] sm:$0xff]
        %v333 = vld [vmem:[%s277 + $0x60] sm:$0xff]
        %v334 = vld [vmem:[%s277 + $0x68] sm:$0xff]
        %v335 = vld [vmem:[%s277 + $0x70] sm:$0xff]
        %v336 = vld [vmem:[%s277 + $0x78] sm:$0xff]
        %v337 = vld [vmem:[%s277 + $0x80] sm:$0xff]
        %v338 = vld [vmem:[%s277 + $0x88] sm:$0xff]
        %v339 = vld [vmem:[%s277 + $0x90] sm:$0xff]
        %v340 = vld [vmem:[%s277 + $0x98] sm:$0xff]
        %v341 = vld [vmem:[%s277 + $0xa0] sm:$0xff]
        %v342 = vld [vmem:[%s277 + $0xa8] sm:$0xff]
        %v343 = vld [vmem:[%s277 + $0xb0] sm:$0xff]
        %v344 = vld [vmem:[%s277 + $0xb8] sm:$0xff]
        %v345 = vld [vmem:[%s277 + $0xc0] sm:$0xff]
        %v346 = vld [vmem:[%s277 + $0xc8] sm:$0xff]
        %v347 = vld [vmem:[%s277 + $0xd0] sm:$0xff]
        %v348 = vld [vmem:[%s277 + $0xd8] sm:$0xff]
        %v349 = vld [vmem:[%s277 + $0xe0] sm:$0xff]
        %v350 = vld [vmem:[%s277 + $0xe8] sm:$0xff]
        %v351 = vld [vmem:[%s277 + $0xf0] sm:$0xff]
        %v352 = vld [vmem:[%s277 + $0xf8] sm:$0xff]
        %354 = vset.pattern.permute.xlu0 0
        %355 = vperm.xlu0 %354, %v289
        %v356 = vpop.permute.xlu0 %355
        %359 = vset.pattern.permute.xlu0 0
        %360 = vperm.xlu0 %359, %v290
        %v361 = vpop.permute.xlu0 %360
        %364 = vset.pattern.permute.xlu0 0
        %365 = vperm.xlu0 %364, %v291
        %v366 = vpop.permute.xlu0 %365
        %369 = vset.pattern.permute.xlu0 0
        %370 = vperm.xlu0 %369, %v292
        %v371 = vpop.permute.xlu0 %370
        %374 = vset.pattern.permute.xlu0 0
        %375 = vperm.xlu0 %374, %v293
        %v376 = vpop.permute.xlu0 %375
        %379 = vset.pattern.permute.xlu0 0
        %380 = vperm.xlu0 %379, %v294
        %v381 = vpop.permute.xlu0 %380
        %384 = vset.pattern.permute.xlu0 0
        %385 = vperm.xlu0 %384, %v295
        %v386 = vpop.permute.xlu0 %385
        %389 = vset.pattern.permute.xlu0 0
        %390 = vperm.xlu0 %389, %v296
        %v391 = vpop.permute.xlu0 %390
        %394 = vset.pattern.permute.xlu0 0
        %395 = vperm.xlu0 %394, %v297
        %v396 = vpop.permute.xlu0 %395
        %399 = vset.pattern.permute.xlu0 0
        %400 = vperm.xlu0 %399, %v298
        %v401 = vpop.permute.xlu0 %400
        %404 = vset.pattern.permute.xlu0 0
        %405 = vperm.xlu0 %404, %v299
        %v406 = vpop.permute.xlu0 %405
        %409 = vset.pattern.permute.xlu0 0
        %410 = vperm.xlu0 %409, %v300
        %v411 = vpop.permute.xlu0 %410
        %414 = vset.pattern.permute.xlu0 0
        %415 = vperm.xlu0 %414, %v301
        %v416 = vpop.permute.xlu0 %415
        %419 = vset.pattern.permute.xlu0 0
        %420 = vperm.xlu0 %419, %v302
        %v421 = vpop.permute.xlu0 %420
        %424 = vset.pattern.permute.xlu0 0
        %425 = vperm.xlu0 %424, %v303
        %v426 = vpop.permute.xlu0 %425
        %429 = vset.pattern.permute.xlu0 0
        %430 = vperm.xlu0 %429, %v304
        %v431 = vpop.permute.xlu0 %430
        %434 = vset.pattern.permute.xlu0 0
        %435 = vperm.xlu0 %434, %v305
        %v436 = vpop.permute.xlu0 %435
        %439 = vset.pattern.permute.xlu0 0
        %440 = vperm.xlu0 %439, %v306
        %v441 = vpop.permute.xlu0 %440
        %444 = vset.pattern.permute.xlu0 0
        %445 = vperm.xlu0 %444, %v307
        %v446 = vpop.permute.xlu0 %445
        %449 = vset.pattern.permute.xlu0 0
        %450 = vperm.xlu0 %449, %v308
        %v451 = vpop.permute.xlu0 %450
        %454 = vset.pattern.permute.xlu0 0
        %455 = vperm.xlu0 %454, %v309
        %v456 = vpop.permute.xlu0 %455
        %459 = vset.pattern.permute.xlu0 0
        %460 = vperm.xlu0 %459, %v310
        %v461 = vpop.permute.xlu0 %460
        %464 = vset.pattern.permute.xlu0 0
        %465 = vperm.xlu0 %464, %v311
        %v466 = vpop.permute.xlu0 %465
        %469 = vset.pattern.permute.xlu0 0
        %470 = vperm.xlu0 %469, %v312
        %v471 = vpop.permute.xlu0 %470
        %474 = vset.pattern.permute.xlu0 0
        %475 = vperm.xlu0 %474, %v313
        %v476 = vpop.permute.xlu0 %475
        %479 = vset.pattern.permute.xlu0 0
        %480 = vperm.xlu0 %479, %v314
        %v481 = vpop.permute.xlu0 %480
        %484 = vset.pattern.permute.xlu0 0
        %485 = vperm.xlu0 %484, %v315
        %v486 = vpop.permute.xlu0 %485
        %489 = vset.pattern.permute.xlu0 0
        %490 = vperm.xlu0 %489, %v316
        %v491 = vpop.permute.xlu0 %490
        %494 = vset.pattern.permute.xlu0 0
        %495 = vperm.xlu0 %494, %v317
        %v496 = vpop.permute.xlu0 %495
        %499 = vset.pattern.permute.xlu0 0
        %500 = vperm.xlu0 %499, %v318
        %v501 = vpop.permute.xlu0 %500
        %504 = vset.pattern.permute.xlu0 0
        %505 = vperm.xlu0 %504, %v319
        %v506 = vpop.permute.xlu0 %505
        %509 = vset.pattern.permute.xlu0 0
        %510 = vperm.xlu0 %509, %v320
        %v511 = vpop.permute.xlu0 %510
        %v513 = vmul.f32 %v356, %v321
        %v514 = vmul.f32 %v361, %v322
        %v515 = vmul.f32 %v366, %v323
        %v516 = vmul.f32 %v371, %v324
        %v517 = vmul.f32 %v376, %v325
        %v518 = vmul.f32 %v381, %v326
        %v519 = vmul.f32 %v386, %v327
        %v520 = vmul.f32 %v391, %v328
        %v521 = vmul.f32 %v396, %v329
        %v522 = vmul.f32 %v401, %v330
        %v523 = vmul.f32 %v406, %v331
        %v524 = vmul.f32 %v411, %v332
        %v525 = vmul.f32 %v416, %v333
        %v526 = vmul.f32 %v421, %v334
        %v527 = vmul.f32 %v426, %v335
        %v528 = vmul.f32 %v431, %v336
        %v529 = vmul.f32 %v436, %v337
        %v530 = vmul.f32 %v441, %v338
        %v531 = vmul.f32 %v446, %v339
        %v532 = vmul.f32 %v451, %v340
        %v533 = vmul.f32 %v456, %v341
        %v534 = vmul.f32 %v461, %v342
        %v535 = vmul.f32 %v466, %v343
        %v536 = vmul.f32 %v471, %v344
        %v537 = vmul.f32 %v476, %v345
        %v538 = vmul.f32 %v481, %v346
        %v539 = vmul.f32 %v486, %v347
        %v540 = vmul.f32 %v491, %v348
        %v541 = vmul.f32 %v496, %v349
        %v542 = vmul.f32 %v501, %v350
        %v543 = vmul.f32 %v506, %v351
        %v544 = vmul.f32 %v511, %v352
        %v545 = vadd.f32 %v513, %v514
        %v546 = vrot.slane %v545, 4
        %v547 = vadd.f32 %v545, %v546
        %v548 = vrot.slane %v547, 2
        %v549 = vadd.f32 %v547, %v548
        %v550 = vrot.slane %v549, 1
        %v551 = vadd.f32 %v549, %v550
        %v552 = vadd.f32 %v515, %v516
        %v553 = vrot.slane %v552, 4
        %v554 = vadd.f32 %v552, %v553
        %v555 = vrot.slane %v554, 2
        %v556 = vadd.f32 %v554, %v555
        %v557 = vrot.slane %v556, 1
        %v558 = vadd.f32 %v556, %v557
        %v559 = vadd.f32 %v517, %v518
        %v560 = vrot.slane %v559, 4
        %v561 = vadd.f32 %v559, %v560
        %v562 = vrot.slane %v561, 2
        %v563 = vadd.f32 %v561, %v562
        %v564 = vrot.slane %v563, 1
        %v565 = vadd.f32 %v563, %v564
        %v566 = vadd.f32 %v519, %v520
        %v567 = vrot.slane %v566, 4
        %v568 = vadd.f32 %v566, %v567
        %v569 = vrot.slane %v568, 2
        %v570 = vadd.f32 %v568, %v569
        %v571 = vrot.slane %v570, 1
        %v572 = vadd.f32 %v570, %v571
        %v573 = vadd.f32 %v521, %v522
        %v574 = vrot.slane %v573, 4
        %v575 = vadd.f32 %v573, %v574
        %v576 = vrot.slane %v575, 2
        %v577 = vadd.f32 %v575, %v576
        %v578 = vrot.slane %v577, 1
        %v579 = vadd.f32 %v577, %v578
        %v580 = vadd.f32 %v523, %v524
        %v581 = vrot.slane %v580, 4
        %v582 = vadd.f32 %v580, %v581
        %v583 = vrot.slane %v582, 2
        %v584 = vadd.f32 %v582, %v583
        %v585 = vrot.slane %v584, 1
        %v586 = vadd.f32 %v584, %v585
        %v587 = vadd.f32 %v525, %v526
        %v588 = vrot.slane %v587, 4
        %v589 = vadd.f32 %v587, %v588
        %v590 = vrot.slane %v589, 2
        %v591 = vadd.f32 %v589, %v590
        %v592 = vrot.slane %v591, 1
        %v593 = vadd.f32 %v591, %v592
        %v594 = vadd.f32 %v527, %v528
        %v595 = vrot.slane %v594, 4
        %v596 = vadd.f32 %v594, %v595
        %v597 = vrot.slane %v596, 2
        %v598 = vadd.f32 %v596, %v597
        %v599 = vrot.slane %v598, 1
        %v600 = vadd.f32 %v598, %v599
        %v601 = vadd.f32 %v529, %v530
        %v602 = vrot.slane %v601, 4
        %v603 = vadd.f32 %v601, %v602
        %v604 = vrot.slane %v603, 2
        %v605 = vadd.f32 %v603, %v604
        %v606 = vrot.slane %v605, 1
        %v607 = vadd.f32 %v605, %v606
        %v608 = vadd.f32 %v531, %v532
        %v609 = vrot.slane %v608, 4
        %v610 = vadd.f32 %v608, %v609
        %v611 = vrot.slane %v610, 2
        %v612 = vadd.f32 %v610, %v611
        %v613 = vrot.slane %v612, 1
        %v614 = vadd.f32 %v612, %v613
        %v615 = vadd.f32 %v533, %v534
        %v616 = vrot.slane %v615, 4
        %v617 = vadd.f32 %v615, %v616
        %v618 = vrot.slane %v617, 2
        %v619 = vadd.f32 %v617, %v618
        %v620 = vrot.slane %v619, 1
        %v621 = vadd.f32 %v619, %v620
        %v622 = vadd.f32 %v535, %v536
        %v623 = vrot.slane %v622, 4
        %v624 = vadd.f32 %v622, %v623
        %v625 = vrot.slane %v624, 2
        %v626 = vadd.f32 %v624, %v625
        %v627 = vrot.slane %v626, 1
        %v628 = vadd.f32 %v626, %v627
        %v629 = vadd.f32 %v537, %v538
        %v630 = vrot.slane %v629, 4
        %v631 = vadd.f32 %v629, %v630
        %v632 = vrot.slane %v631, 2
        %v633 = vadd.f32 %v631, %v632
        %v634 = vrot.slane %v633, 1
        %v635 = vadd.f32 %v633, %v634
        %v636 = vadd.f32 %v539, %v540
        %v637 = vrot.slane %v636, 4
        %v638 = vadd.f32 %v636, %v637
        %v639 = vrot.slane %v638, 2
        %v640 = vadd.f32 %v638, %v639
        %v641 = vrot.slane %v640, 1
        %v642 = vadd.f32 %v640, %v641
        %v643 = vadd.f32 %v541, %v542
        %v644 = vrot.slane %v643, 4
        %v645 = vadd.f32 %v643, %v644
        %v646 = vrot.slane %v645, 2
        %v647 = vadd.f32 %v645, %v646
        %v648 = vrot.slane %v647, 1
        %v649 = vadd.f32 %v647, %v648
        %v650 = vadd.f32 %v543, %v544
        %v651 = vrot.slane %v650, 4
        %v652 = vadd.f32 %v650, %v651
        %v653 = vrot.slane %v652, 2
        %v654 = vadd.f32 %v652, %v653
        %v655 = vrot.slane %v654, 1
        %v656 = vadd.f32 %v654, %v655
        %vm673 = vcmask 1041409
        %v674 = vsel %vm673, %v558, %v551
        %vm675 = vcmask 1042434
        %v676 = vsel %vm675, %v565, %v674
        %vm677 = vcmask 1043459
        %v678 = vsel %vm677, %v572, %v676
        %vm679 = vcmask 1044484
        %v680 = vsel %vm679, %v579, %v678
        %vm681 = vcmask 1045509
        %v682 = vsel %vm681, %v586, %v680
        %vm683 = vcmask 1046534
        %v684 = vsel %vm683, %v593, %v682
        %vm685 = vcmask 1047559
        %v686 = vsel %vm685, %v600, %v684
        %v687 = vsel %vm673, %v614, %v607
        %v688 = vsel %vm675, %v621, %v687
        %v689 = vsel %vm677, %v628, %v688
        %v690 = vsel %vm679, %v635, %v689
        %v691 = vsel %vm681, %v642, %v690
        %v692 = vsel %vm683, %v649, %v691
        %v693 = vsel %vm685, %v656, %v692
        %v696 = vmul.f32 %v287, %v686
        %v697 = vmul.f32 %v288, %v693
        %v698 = vld [vmem:[#allocation5] sm:$0xff]
        %v699 = vld [vmem:[#allocation5 + $0x8] sm:$0xff]
        %v700 = vld [vmem:[#allocation5 + $0x10] sm:$0xff]
        %v701 = vld [vmem:[#allocation5 + $0x18] sm:$0xff]
        %v702 = vld [vmem:[#allocation5 + $0x20] sm:$0xff]
        %v703 = vld [vmem:[#allocation5 + $0x28] sm:$0xff]
        %v704 = vld [vmem:[#allocation5 + $0x30] sm:$0xff]
        %v705 = vld [vmem:[#allocation5 + $0x38] sm:$0xff]
        %v706 = vld [vmem:[#allocation5 + $0x40] sm:$0xff]
        %v707 = vld [vmem:[#allocation5 + $0x48] sm:$0xff]
        %v708 = vld [vmem:[#allocation5 + $0x50] sm:$0xff]
        %v709 = vld [vmem:[#allocation5 + $0x58] sm:$0xff]
        %v710 = vld [vmem:[#allocation5 + $0x60] sm:$0xff]
        %v711 = vld [vmem:[#allocation5 + $0x68] sm:$0xff]
        %v712 = vld [vmem:[#allocation5 + $0x70] sm:$0xff]
        %v713 = vld [vmem:[#allocation5 + $0x78] sm:$0xff]
        %v714 = vld [vmem:[#allocation5 + $0x80] sm:$0xff]
        %v715 = vld [vmem:[#allocation5 + $0x88] sm:$0xff]
        %v716 = vld [vmem:[#allocation5 + $0x90] sm:$0xff]
        %v717 = vld [vmem:[#allocation5 + $0x98] sm:$0xff]
        %v718 = vld [vmem:[#allocation5 + $0xa0] sm:$0xff]
        %v719 = vld [vmem:[#allocation5 + $0xa8] sm:$0xff]
        %v720 = vld [vmem:[#allocation5 + $0xb0] sm:$0xff]
        %v721 = vld [vmem:[#allocation5 + $0xb8] sm:$0xff]
        %v722 = vld [vmem:[#allocation5 + $0xc0] sm:$0xff]
        %v723 = vld [vmem:[#allocation5 + $0xc8] sm:$0xff]
        %v724 = vld [vmem:[#allocation5 + $0xd0] sm:$0xff]
        %v725 = vld [vmem:[#allocation5 + $0xd8] sm:$0xff]
        %v726 = vld [vmem:[#allocation5 + $0xe0] sm:$0xff]
        %v727 = vld [vmem:[#allocation5 + $0xe8] sm:$0xff]
        %v728 = vld [vmem:[#allocation5 + $0xf0] sm:$0xff]
        %v729 = vld [vmem:[#allocation5 + $0xf8] sm:$0xff]
        %v730 = vld [vmem:[#allocation5 + $0x100] sm:$0xff]
        %v731 = vld [vmem:[#allocation5 + $0x108] sm:$0xff]
        %v732 = vld [vmem:[#allocation5 + $0x110] sm:$0xff]
        %v733 = vld [vmem:[#allocation5 + $0x118] sm:$0xff]
        %v734 = vld [vmem:[#allocation5 + $0x120] sm:$0xff]
        %v735 = vld [vmem:[#allocation5 + $0x128] sm:$0xff]
        %v736 = vld [vmem:[#allocation5 + $0x130] sm:$0xff]
        %v737 = vld [vmem:[#allocation5 + $0x138] sm:$0xff]
        %v738 = vld [vmem:[#allocation5 + $0x140] sm:$0xff]
        %v739 = vld [vmem:[#allocation5 + $0x148] sm:$0xff]
        %v740 = vld [vmem:[#allocation5 + $0x150] sm:$0xff]
        %v741 = vld [vmem:[#allocation5 + $0x158] sm:$0xff]
        %v742 = vld [vmem:[#allocation5 + $0x160] sm:$0xff]
        %v743 = vld [vmem:[#allocation5 + $0x168] sm:$0xff]
        %v744 = vld [vmem:[#allocation5 + $0x170] sm:$0xff]
        %v745 = vld [vmem:[#allocation5 + $0x178] sm:$0xff]
        %v746 = vld [vmem:[#allocation5 + $0x180] sm:$0xff]
        %v747 = vld [vmem:[#allocation5 + $0x188] sm:$0xff]
        %v748 = vld [vmem:[#allocation5 + $0x190] sm:$0xff]
        %v749 = vld [vmem:[#allocation5 + $0x198] sm:$0xff]
        %v750 = vld [vmem:[#allocation5 + $0x1a0] sm:$0xff]
        %v751 = vld [vmem:[#allocation5 + $0x1a8] sm:$0xff]
        %v752 = vld [vmem:[#allocation5 + $0x1b0] sm:$0xff]
        %v753 = vld [vmem:[#allocation5 + $0x1b8] sm:$0xff]
        %v754 = vld [vmem:[#allocation5 + $0x1c0] sm:$0xff]
        %v755 = vld [vmem:[#allocation5 + $0x1c8] sm:$0xff]
        %v756 = vld [vmem:[#allocation5 + $0x1d0] sm:$0xff]
        %v757 = vld [vmem:[#allocation5 + $0x1d8] sm:$0xff]
        %v758 = vld [vmem:[#allocation5 + $0x1e0] sm:$0xff]
        %v759 = vld [vmem:[#allocation5 + $0x1e8] sm:$0xff]
        %v760 = vld [vmem:[#allocation5 + $0x1f0] sm:$0xff]
        %v761 = vld [vmem:[#allocation5 + $0x1f8] sm:$0xff]
        %v762 = vld [vmem:[#allocation5 + $0x200] sm:$0xff]
        %v763 = vld [vmem:[#allocation5 + $0x208] sm:$0xff]
        %v764 = vld [vmem:[#allocation5 + $0x210] sm:$0xff]
        %v765 = vld [vmem:[#allocation5 + $0x218] sm:$0xff]
        %v766 = vld [vmem:[#allocation5 + $0x220] sm:$0xff]
        %v767 = vld [vmem:[#allocation5 + $0x228] sm:$0xff]
        %v768 = vld [vmem:[#allocation5 + $0x230] sm:$0xff]
        %v769 = vld [vmem:[#allocation5 + $0x238] sm:$0xff]
        %v770 = vld [vmem:[#allocation5 + $0x240] sm:$0xff]
        %v771 = vld [vmem:[#allocation5 + $0x248] sm:$0xff]
        %v772 = vld [vmem:[#allocation5 + $0x250] sm:$0xff]
        %v773 = vld [vmem:[#allocation5 + $0x258] sm:$0xff]
        %v774 = vld [vmem:[#allocation5 + $0x260] sm:$0xff]
        %v775 = vld [vmem:[#allocation5 + $0x268] sm:$0xff]
        %v776 = vld [vmem:[#allocation5 + $0x270] sm:$0xff]
        %v777 = vld [vmem:[#allocation5 + $0x278] sm:$0xff]
        %v778 = vld [vmem:[#allocation5 + $0x280] sm:$0xff]
        %v779 = vld [vmem:[#allocation5 + $0x288] sm:$0xff]
        %v780 = vld [vmem:[#allocation5 + $0x290] sm:$0xff]
        %v781 = vld [vmem:[#allocation5 + $0x298] sm:$0xff]
        %v782 = vld [vmem:[#allocation5 + $0x2a0] sm:$0xff]
        %v783 = vld [vmem:[#allocation5 + $0x2a8] sm:$0xff]
        %v784 = vld [vmem:[#allocation5 + $0x2b0] sm:$0xff]
        %v785 = vld [vmem:[#allocation5 + $0x2b8] sm:$0xff]
        %v786 = vld [vmem:[#allocation5 + $0x2c0] sm:$0xff]
        %v787 = vld [vmem:[#allocation5 + $0x2c8] sm:$0xff]
        %v788 = vld [vmem:[#allocation5 + $0x2d0] sm:$0xff]
        %v789 = vld [vmem:[#allocation5 + $0x2d8] sm:$0xff]
        %v790 = vld [vmem:[#allocation5 + $0x2e0] sm:$0xff]
        %v791 = vld [vmem:[#allocation5 + $0x2e8] sm:$0xff]
        %v792 = vld [vmem:[#allocation5 + $0x2f0] sm:$0xff]
        %v793 = vld [vmem:[#allocation5 + $0x2f8] sm:$0xff]
        %794 = vmatpush.msra.mxu0 %v728
        %795 = vmatpush.msra.mxu0 %v726
        %796 = vmatpush.msra.mxu0 %v724
        %797 = vmatpush.msra.mxu0 %v722
        %798 = vmatpush.msra.mxu0 %v720
        %799 = vmatpush.msra.mxu0 %v718
        %800 = vmatpush.msra.mxu0 %v716
        %801 = vmatpush.msra.mxu0 %v714
        %802 = vmatpush.msra.mxu0 %v712
        %803 = vmatpush.msra.mxu0 %v710
        %804 = vmatpush.msra.mxu0 %v708
        %805 = vmatpush.msra.mxu0 %v706
        %806 = vmatpush.msra.mxu0 %v704
        %807 = vmatpush.msra.mxu0 %v702
        %808 = vmatpush.msra.mxu0 %v700
        %809 = vmatpush.msra.mxu0 %v698
        %810 = vmatmul.f32.gmra.mxu0 %v287
        %v811 = vpop.f32.mrf.mxu0
        %v812 = vadd.f32 0.0, %v811
        %813 = vmatmul.f32.gmra.mxu0 %v288
        %v814 = vpop.f32.mrf.mxu0
        %v815 = vadd.f32 0.0, %v814
        %816 = vdwg.mxu0
        %817 = vmatpush.msra.mxu0 %v760
        %818 = vmatpush.msra.mxu0 %v758
        %819 = vmatpush.msra.mxu0 %v756
        %820 = vmatpush.msra.mxu0 %v754
        %821 = vmatpush.msra.mxu0 %v752
        %822 = vmatpush.msra.mxu0 %v750
        %823 = vmatpush.msra.mxu0 %v748
        %824 = vmatpush.msra.mxu0 %v746
        %825 = vmatpush.msra.mxu0 %v744
        %826 = vmatpush.msra.mxu0 %v742
        %827 = vmatpush.msra.mxu0 %v740
        %828 = vmatpush.msra.mxu0 %v738
        %829 = vmatpush.msra.mxu0 %v736
        %830 = vmatpush.msra.mxu0 %v734
        %831 = vmatpush.msra.mxu0 %v732
        %832 = vmatpush.msra.mxu0 %v730
        %833 = vmatmul.f32.gmra.mxu0 %v686
        %v834 = vpop.f32.mrf.mxu0
        %v835 = vadd.f32 %v812, %v834
        %836 = vmatmul.f32.gmra.mxu0 %v693
        %v837 = vpop.f32.mrf.mxu0
        %v838 = vadd.f32 %v815, %v837
        %839 = vdwg.mxu0
        %840 = vmatpush.msra.mxu0 %v792
        %841 = vmatpush.msra.mxu0 %v790
        %842 = vmatpush.msra.mxu0 %v788
        %843 = vmatpush.msra.mxu0 %v786
        %844 = vmatpush.msra.mxu0 %v784
        %845 = vmatpush.msra.mxu0 %v782
        %846 = vmatpush.msra.mxu0 %v780
        %847 = vmatpush.msra.mxu0 %v778
        %848 = vmatpush.msra.mxu0 %v776
        %849 = vmatpush.msra.mxu0 %v774
        %850 = vmatpush.msra.mxu0 %v772
        %851 = vmatpush.msra.mxu0 %v770
        %852 = vmatpush.msra.mxu0 %v768
        %853 = vmatpush.msra.mxu0 %v766
        %854 = vmatpush.msra.mxu0 %v764
        %855 = vmatpush.msra.mxu0 %v762
        %856 = vmatmul.f32.gmra.mxu0 %v696
        %v857 = vpop.f32.mrf.mxu0
        %v858 = vadd.f32 %v835, %v857
        %859 = vmatmul.f32.gmra.mxu0 %v697
        %v860 = vpop.f32.mrf.mxu0
        %v861 = vadd.f32 %v838, %v860
        %862 = vdwg.mxu0
        %863 = vmatpush.msra.mxu0 %v729
        %864 = vmatpush.msra.mxu0 %v727
        %865 = vmatpush.msra.mxu0 %v725
        %866 = vmatpush.msra.mxu0 %v723
        %867 = vmatpush.msra.mxu0 %v721
        %868 = vmatpush.msra.mxu0 %v719
        %869 = vmatpush.msra.mxu0 %v717
        %870 = vmatpush.msra.mxu0 %v715
        %871 = vmatpush.msra.mxu0 %v713
        %872 = vmatpush.msra.mxu0 %v711
        %873 = vmatpush.msra.mxu0 %v709
        %874 = vmatpush.msra.mxu0 %v707
        %875 = vmatpush.msra.mxu0 %v705
        %876 = vmatpush.msra.mxu0 %v703
        %877 = vmatpush.msra.mxu0 %v701
        %878 = vmatpush.msra.mxu0 %v699
        %879 = vmatmul.f32.gmra.mxu0 %v287
        %v880 = vpop.f32.mrf.mxu0
        %v881 = vadd.f32 0.0, %v880
        %882 = vmatmul.f32.gmra.mxu0 %v288
        %v883 = vpop.f32.mrf.mxu0
        %v884 = vadd.f32 0.0, %v883
        %885 = vdwg.mxu0
        %886 = vmatpush.msra.mxu0 %v761
        %887 = vmatpush.msra.mxu0 %v759
        %888 = vmatpush.msra.mxu0 %v757
        %889 = vmatpush.msra.mxu0 %v755
        %890 = vmatpush.msra.mxu0 %v753
        %891 = vmatpush.msra.mxu0 %v751
        %892 = vmatpush.msra.mxu0 %v749
        %893 = vmatpush.msra.mxu0 %v747
        %894 = vmatpush.msra.mxu0 %v745
        %895 = vmatpush.msra.mxu0 %v743
        %896 = vmatpush.msra.mxu0 %v741
        %897 = vmatpush.msra.mxu0 %v739
        %898 = vmatpush.msra.mxu0 %v737
        %899 = vmatpush.msra.mxu0 %v735
        %900 = vmatpush.msra.mxu0 %v733
        %901 = vmatpush.msra.mxu0 %v731
        %902 = vmatmul.f32.gmra.mxu0 %v686
        %v903 = vpop.f32.mrf.mxu0
        %v904 = vadd.f32 %v881, %v903
        %905 = vmatmul.f32.gmra.mxu0 %v693
        %v906 = vpop.f32.mrf.mxu0
        %v907 = vadd.f32 %v884, %v906
        %908 = vdwg.mxu0
        %909 = vmatpush.msra.mxu0 %v793
        %910 = vmatpush.msra.mxu0 %v791
        %911 = vmatpush.msra.mxu0 %v789
        %912 = vmatpush.msra.mxu0 %v787
        %913 = vmatpush.msra.mxu0 %v785
        %914 = vmatpush.msra.mxu0 %v783
        %915 = vmatpush.msra.mxu0 %v781
        %916 = vmatpush.msra.mxu0 %v779
        %917 = vmatpush.msra.mxu0 %v777
        %918 = vmatpush.msra.mxu0 %v775
        %919 = vmatpush.msra.mxu0 %v773
        %920 = vmatpush.msra.mxu0 %v771
        %921 = vmatpush.msra.mxu0 %v769
        %922 = vmatpush.msra.mxu0 %v767
        %923 = vmatpush.msra.mxu0 %v765
        %924 = vmatpush.msra.mxu0 %v763
        %925 = vmatmul.f32.gmra.mxu0 %v696
        %v926 = vpop.f32.mrf.mxu0
        %v927 = vadd.f32 %v904, %v926
        %928 = vmatmul.f32.gmra.mxu0 %v697
        %v929 = vpop.f32.mrf.mxu0
        %v930 = vadd.f32 %v907, %v929
        %931 = vdwg.mxu0
        %v932 = vtanh.pop %v858
        %v933 = vtanh.pop %v861
        %v934 = vxor.u32 %v927, 2147483648
        %v935 = vxor.u32 %v930, 2147483648
        %v936 = vmul.f32 %v934, 1.442695
        %v937 = vpow.pop %v936
        %v938 = vmul.f32 %v935, 1.442695
        %v939 = vpow.pop %v938
        %v940 = vadd.f32 %v937, 1.0
        %v941 = vadd.f32 %v939, 1.0
        %v942 = vrcp.pop %v940
        %v943 = vmul.f32 %v940, %v942
        %v944 = vsub.f32 1.0, %v943
        %v945 = vmul.f32 %v942, %v944
        %v946 = vadd.f32 %v942, %v945
        %vm947 = vweird.f32 %v940
        %vm948 = vweird.f32 %v942
        %vm949 = vmor %vm947, %vm948
        %v950 = vsel %vm949, %v942, %v946
        %v951 = vand.u32 2147483647, %v940
        %vm952 = vcmp.eq.f32.partialorder %v951, 8.507059e+37
        %v953 = vand.u32 %v940, 2147483648
        %v954 = vor.u32 1.1754944e-38, %v953
        %v955 = vsel %vm952, %v954, %v950
        %v956 = vmul.f32 1.0, %v955
        %v957 = vrcp.pop %v941
        %v958 = vmul.f32 %v941, %v957
        %v959 = vsub.f32 1.0, %v958
        %v960 = vmul.f32 %v957, %v959
        %v961 = vadd.f32 %v957, %v960
        %vm962 = vweird.f32 %v941
        %vm963 = vweird.f32 %v957
        %vm964 = vmor %vm962, %vm963
        %v965 = vsel %vm964, %v957, %v961
        %v966 = vand.u32 2147483647, %v941
        %vm967 = vcmp.eq.f32.partialorder %v966, 8.507059e+37
        %v968 = vand.u32 %v941, 2147483648
        %v969 = vor.u32 1.1754944e-38, %v968
        %v970 = vsel %vm967, %v969, %v965
        %v971 = vmul.f32 1.0, %v970
        %v972 = vmul.f32 %v956, %v932
        %v973 = vmul.f32 %v971, %v933
        %v974 = vsub.f32 1.0, %v956
        %v975 = vsub.f32 1.0, %v971
        %v976 = vmul.f32 %v974, %v287
        %v977 = vmul.f32 %v975, %v288
        %v978 = vadd.f32 %v972, %v976
        %v979 = vadd.f32 %v973, %v977
        %980 = vst [vmem:[%s270] sm:$0xff] %v978
        %981 = vst [vmem:[%s270 + $0x8] sm:$0xff] %v979
        %s982 = sand.u32 %s129, 1
        %s983 = scalar_lea.sflag [#allocation4], %s982
        %s984 = sand.u32 %s129, 1
        %s985 = smul.addr %s984, 16
        %s986 = scalar_lea.vmem [#allocation7], %s985
        // Predicated region
        $region45: #{tpu_custom_call.1} parent=35 // pred_check
          %p987 = pneg %p139
        $region46: #{tpu_custom_call.1} parent=35 // pred_check_branch
          %989 = sbr.rel (%p987) target = $region48
        $region47: #{tpu_custom_call.1} parent=35 // pred_region
          %s990 = smul.u32 2, %s22
          %992 = vsyncadd %s983, 0
          %s993 = smul.addr %s990, 8
          %s994 = scalar_lea.hbm %s4, %s993
          %s995 = sshll.u32 %s986, 4
          %s996 = int_to_ptr.vmem [resolvable:$true] %s995
          %s997 = sshll.u32 %s994, 4
          %s998 = int_to_ptr.hbm [resolvable:$true] %s997
          %1003 = dma.vmem_to_hbm [thread:$0]  %s996, 256, %s998, %s983, 128, 128, 8
        $region48: #{tpu_custom_call.1} parent=35 // pred_fallthru
          _
      $region36: #{tpu_custom_call.1} parent=5 // pred_fallthru
        _
      %p1004 = scmp.le.s32.totalorder 2, %s17
      // Predicated region
      $region49: #{tpu_custom_call.1} parent=5 // pred_check
        %p1005 = pneg %p1004
      $region50: #{tpu_custom_call.1} parent=5 // pred_check_branch
        %1007 = sbr.rel (%p1005) target = $region52
      $region51: #{tpu_custom_call.1} parent=5 // pred_region
        %s1008 = ssub.s32 %s17, 2
        // Predicated region
        $region53: #{tpu_custom_call.1} parent=51 // pred_check
          %p1009 = pneg %p145
        $region54: #{tpu_custom_call.1} parent=51 // pred_check_branch
          %1011 = sbr.rel (%p1009) target = $region56
        $region55: #{tpu_custom_call.1} parent=51 // pred_region
          %s1012 = sand.u32 %s130, 1
          %s1013 = scalar_lea.sflag [#allocation4], %s1012
          %s1014 = sand.u32 %s130, 1
          %s1015 = smul.addr %s1014, 16
          %s1016 = scalar_lea.vmem [#allocation7], %s1015
          %1018 = dma.done %s1013, 256
        $region56: #{tpu_custom_call.1} parent=51 // pred_fallthru
          _
      $region52: #{tpu_custom_call.1} parent=5 // pred_fallthru
        _
    $region6: #{tpu_custom_call.1} parent=1 // loop_footer
      %s21 = sadd.s32 1, %s17
    $region7: #{tpu_custom_call.1} parent=1 // loop_footer_branch
      %16 = sbr.rel target = $region3
    $region8: #{tpu_custom_call.1} parent=1 // loop_exit
      _
    %1019 = vsyncpa [#allocation3], 1
    %s1020 = scalar_lea.sflag [#allocation3], 1
    %1021 = vsyncpa %s1020, 1
    %1022 = vsyncpa [#allocation6], 1
    %1023 = vsyncpa [#allocation4], 1
    %s1024 = scalar_lea.sflag [#allocation4], 1
    %1025 = vsyncpa %s1024, 1

</llo_original>
